<compile_context>
chip_gen: v7x
topology: tpu7x:2x2x1
jax: 0.10.0
libtpu: 0.0.40
codegen_flags: <defaults>
</compile_context>

<pallas_src>
import functools

import jax
import jax.numpy as jnp
import numpy as np
from jax.experimental import pallas as pl
from jax.experimental.pallas import tpu as pltpu

BN_EPS = 1e-5


# ----------------------------- Pallas kernel ---------------------------------
def _guided_filter_kernel(x_ref, k_ref, p_ref, o_ref, *, n, c, h, w, radius):
    """Whole ConvGuidedFilter forward, channel-major flattened layout.

    x_ref : (N*C, HW)  VMEM  input, spatial dims flattened row-major
    k_ref : (5,  HW)   VMEM  [1/N, mask_left, mask_right, mask_up, mask_down]
    p_ref : (3C+2C^2,) SMEM  packed scalars: w1_rowsum | b1 | b2 | w2 | w3
    o_ref : (N*C, HW)  VMEM  output (full (8,128)-aligned f32 tile, lane-dense)
    """
    hw = h * w
    inv_n = k_ref[0:1, :]          # 1 / box_filter(ones(1, C, H, W))
    m_l = k_ref[1:2, :]            # left  tap (col - radius) in bounds
    m_r = k_ref[2:3, :]            # right tap (col + radius) in bounds
    m_u = k_ref[3:4, :]            # up    tap (row - radius) in bounds
    m_d = k_ref[4:5, :]            # down  tap (row + radius) in bounds

    def box_mean(v):
        """Zero-padded 3x3 (dilation=radius) box sum of a flattened (H, W) map,
        divided by N.  Lane rolls + destination edge masks; rolled wrap elements
        always land on masked positions, so they never contribute."""
        hs = v
        if radius < w:
            hs = hs + pltpu.roll(v, radius, 1) * m_l \
                    + pltpu.roll(v, hw - radius, 1) * m_r
        bs = hs
        if radius < h:
            bs = bs + pltpu.roll(hs, radius * w, 1) * m_u \
                    + pltpu.roll(hs, hw - radius * w, 1) * m_d
        return bs * inv_n

    # Packed-scalar layout in SMEM.
    off_w1s, off_b1, off_b2 = 0, c, 2 * c
    off_w2, off_w3 = 3 * c, 3 * c + c * c

    for img in range(n):                                     # static unroll over batch
        xi = x_ref[img * c:(img + 1) * c, :]                 # (C, HW)
        s = jnp.sum(xi, axis=0, keepdims=True)               # sum_c x       (1, HW)
        s2 = jnp.sum(xi * xi, axis=0, keepdims=True)         # sum_c x^2     (1, HW)
        # box_filter has groups=1 and all-ones weights, so every output channel
        # equals the box sum of the channel sum: one row per image suffices.
        mean_x = box_mean(s)
        cov_xy = box_mean(s2) - mean_x * mean_x

        # conv_a: 1x1 -> BN -> ReLU -> 1x1 -> BN -> ReLU -> 1x1 (BN folded, eval).
        # test = cat([cov_xy, cov_xy], 1) has 2C identical channels, so the first
        # 1x1 collapses to a per-channel scalar (w1_rowsum) times cov_xy.
        y1 = [jnp.maximum(p_ref[off_w1s + o] * cov_xy + p_ref[off_b1 + o], 0.0)
              for o in range(c)]
        y2 = []
        for o in range(c):
            acc = p_ref[off_w2 + o * c] * y1[0]
            for i in range(1, c):
                acc = acc + p_ref[off_w2 + o * c + i] * y1[i]
            y2.append(jnp.maximum(acc + p_ref[off_b2 + o], 0.0))
        for o in range(c):
            a = p_ref[off_w3 + o * c] * y2[0]
            for i in range(1, c):
                a = a + p_ref[off_w3 + o * c + i] * y2[i]
            # b = mean_x - A*mean_x; interpolate to the input's own (H, W) with
            # align_corners=True is the identity, so out = A*(x - mean_x) + mean_x.
            row = img * c + o
            o_ref[row:row + 1, :] = a * (x_ref[row:row + 1, :] - mean_x) + mean_x


# ----------------------------- wrapper ----------------------------------------
def _fold_bn(bn):
    gamma, beta, mean, var = bn
    scale = gamma / jnp.sqrt(var + BN_EPS)
    return scale, beta - mean * scale


def _box_consts(h, w, c, radius):
    """Host-side numpy constants for the rolled box filter: inverse normalization
    map (1/N) and the four edge-validity masks.  Shape (5, H*W) float32."""
    col = np.tile(np.arange(w), h)[None, :]
    row = np.repeat(np.arange(h), w)[None, :]
    m_l = (col - radius >= 0).astype(np.float32)
    m_r = (col + radius <= w - 1).astype(np.float32)
    m_u = (row - radius >= 0).astype(np.float32)
    m_d = (row + radius <= h - 1).astype(np.float32)
    count = (1.0 + m_l + m_r) * (1.0 + m_u + m_d)    # valid taps of the dilated 3x3
    inv_n = 1.0 / (c * count)                        # N = box_filter(ones(1,C,H,W))
    return np.concatenate([inv_n, m_l, m_r, m_u, m_d], axis=0).astype(np.float32)


def conv_guided_filter(x_lr, params, radius=1):
    """ConvGuidedFilter.forward(x_lr); BatchNorm folded in inference mode."""
    n, c, h, w = x_lr.shape
    hw = h * w

    # Fold BN (eval) into the 1x1 weights; collapse conv_a[0] to per-channel
    # row-sums (its input has identical channels).
    scale1, bias1 = _fold_bn(params["bn1"])
    scale2, bias2 = _fold_bn(params["bn2"])
    w1_rowsum = (params["w1"] * scale1[:, None]).sum(axis=1)          # (C,)
    w2_eff = params["w2"] * scale2[:, None]                           # (C, C)
    scalars = jnp.concatenate([
        w1_rowsum, bias1, bias2, w2_eff.reshape(-1), params["w3"].reshape(-1)
    ]).astype(jnp.float32)                                            # (3C + 2C^2,)

    consts = jnp.asarray(_box_consts(h, w, c, radius))                # (5, HW) const

    x_flat = x_lr.astype(jnp.float32).reshape(n * c, hw)              # free view

    kernel = functools.partial(_guided_filter_kernel,
                               n=n, c=c, h=h, w=w, radius=radius)
    out_flat = pl.pallas_call(
        kernel,
        out_shape=jax.ShapeDtypeStruct((n * c, hw), jnp.float32),
        in_specs=[
            pl.BlockSpec(memory_space=pltpu.MemorySpace.VMEM),        # x      (N*C, HW)
            pl.BlockSpec(memory_space=pltpu.MemorySpace.VMEM),        # consts (5, HW)
            pl.BlockSpec(memory_space=pltpu.MemorySpace.SMEM),        # packed scalars
        ],
        out_specs=pl.BlockSpec(memory_space=pltpu.MemorySpace.VMEM),
    )(x_flat, consts, scalars)
    return out_flat.reshape(n, c, h, w)


# ----------------------------- pure-JAX reference -----------------------------
def conv_guided_filter_reference(x_lr, params, radius=1):
    """Direct transcription of the PyTorch forward (BN in eval mode)."""
    _, c, h, w = x_lr.shape
    hp = jax.lax.Precision.HIGHEST
    w_box = jnp.ones((c, c, 3, 3), jnp.float32)    # box_filter.weight[...] = 1.0

    def box(v):
        return jax.lax.conv_general_dilated(
            v, w_box, window_strides=(1, 1),
            padding=((radius, radius), (radius, radius)),
            rhs_dilation=(radius, radius),
            dimension_numbers=("NCHW", "OIHW", "NCHW"), precision=hp)

    def pw(v, wgt):                                # 1x1 conv, bias=False
        return jnp.einsum("oc,nchw->nohw", wgt, v, precision=hp)

    def bn(v, stats):
        gamma, beta, mean, var = stats
        inv = gamma / jnp.sqrt(var + BN_EPS)
        return (v - mean[None, :, None, None]) * inv[None, :, None, None] \
            + beta[None, :, None, None]

    n_box = box(jnp.ones((1, c, h, w), jnp.float32))
    mean_x = box(x_lr) / n_box
    cov_xy = box(x_lr * x_lr) / n_box - mean_x * mean_x
    test = jnp.concatenate([cov_xy, cov_xy], axis=1)

    y = jnp.maximum(bn(pw(test, params["w1"]), params["bn1"]), 0.0)
    y = jnp.maximum(bn(pw(y, params["w2"]), params["bn2"]), 0.0)
    a = pw(y, params["w3"])
    b = mean_x - a * mean_x
    # F.interpolate(..., (h, w), bilinear, align_corners=True) at the same
    # resolution is exactly the identity.
    return a * x_lr + b


# ----------------------------- parameter init ---------------------------------
def init_params(key, c):
    ks = jax.random.split(key, 5)

    def wgt(k, shape, scale=0.3):
        return scale * jax.random.normal(k, shape, jnp.float32)

    def bn_stats(k):
        k1, k2, k3, k4 = jax.random.split(k, 4)
        return (1.0 + 0.1 * jax.random.normal(k1, (c,), jnp.float32),   # gamma
                0.1 * jax.random.normal(k2, (c,), jnp.float32),         # beta
                0.1 * jax.random.normal(k3, (c,), jnp.float32),         # running_mean
                1.0 + 0.1 * jnp.abs(jax.random.normal(k4, (c,), jnp.float32)))  # var

    # TODO(synk): BatchNorm is folded in inference mode (running stats);
    # training-mode batch-statistics BN is not implemented.
    return {
        "w1": wgt(ks[0], (c, 2 * c)),   # conv_a[0]: Conv2d(2c, c, 1, bias=False)
        "w2": wgt(ks[1], (c, c)),       # conv_a[3]: Conv2d(c,  c, 1, bias=False)
        "w3": wgt(ks[2], (c, c)),       # conv_a[6]: Conv2d(c,  c, 1, bias=False)
        "bn1": bn_stats(ks[3]),
        "bn2": bn_stats(ks[4]),
    }


# ----------------------------- main --------------------------------------------
if __name__ == "__main__":
    OUT_CH = 4                 # channels of x_lr == module's out_channels
    IN_CH = 2 * OUT_CH         # conv_a input channels (cat([cov_xy, cov_xy]))
    BATCH, H, W = 2, 16, 16

    key = jax.random.PRNGKey(0)
    kp, kx = jax.random.split(key)
    params = init_params(kp, OUT_CH)
    assert params["w1"].shape == (OUT_CH, IN_CH)

    x_lr = jax.random.normal(kx, (BATCH, OUT_CH, H, W), dtype=jnp.float32)

    out = jax.jit(conv_guided_filter)(x_lr, params)
    jax.block_until_ready(out)

    ref = jax.jit(conv_guided_filter_reference)(x_lr, params)
    jax.block_until_ready(ref)

    assert out.shape == (BATCH, OUT_CH, H, W) and out.dtype == jnp.float32
    assert bool(jnp.all(jnp.isfinite(out)))
    # The kernel is exact f32 (VPU/XLU only, no MXU), so the tolerance only has
    # to cover summation-order / fold-order rounding vs. the HIGHEST-precision
    # XLA reference — no bf16 matmul rounding is hidden here.
    assert bool(jnp.allclose(out, ref, rtol=1e-4, atol=1e-4))
    print("KERNEL_OK")
</pallas_src>

<mosaic_0001>
module attributes {stable_mosaic.version = 11 : i64} {
  func.func @_guided_filter_kernel(%arg0: memref<8x256xf32, #tpu.memory_space<vmem>>, %arg1: memref<5x256xf32, #tpu.memory_space<vmem>>, %arg2: memref<44xf32, #tpu.memory_space<smem>>, %arg3: memref<8x256xf32, #tpu.memory_space<vmem>>) attributes {dimension_semantics = [], scalar_prefetch = 0 : i64, scratch_operands = 0 : i64, tpu.core_type = #tpu.core_type<tc>} {
    %c0 = arith.constant 0 : index
    %c0_0 = arith.constant 0 : index
    %0 = vector.load %arg1[%c0, %c0_0] : memref<5x256xf32, #tpu.memory_space<vmem>>, vector<1x256xf32>
    %c1 = arith.constant 1 : index
    %c0_1 = arith.constant 0 : index
    %1 = vector.load %arg1[%c1, %c0_1] : memref<5x256xf32, #tpu.memory_space<vmem>>, vector<1x256xf32>
    %c2 = arith.constant 2 : index
    %c0_2 = arith.constant 0 : index
    %2 = vector.load %arg1[%c2, %c0_2] : memref<5x256xf32, #tpu.memory_space<vmem>>, vector<1x256xf32>
    %c3 = arith.constant 3 : index
    %c0_3 = arith.constant 0 : index
    %3 = vector.load %arg1[%c3, %c0_3] : memref<5x256xf32, #tpu.memory_space<vmem>>, vector<1x256xf32>
    %c4 = arith.constant 4 : index
    %c0_4 = arith.constant 0 : index
    %4 = vector.load %arg1[%c4, %c0_4] : memref<5x256xf32, #tpu.memory_space<vmem>>, vector<1x256xf32>
    %c0_5 = arith.constant 0 : index
    %c0_6 = arith.constant 0 : index
    %5 = vector.load %arg0[%c0_5, %c0_6] : memref<8x256xf32, #tpu.memory_space<vmem>>, vector<4x256xf32>
    %cst = arith.constant dense<0.000000e+00> : vector<256xf32>
    %6 = vector.multi_reduction <add>, %5, %cst [0] : vector<4x256xf32> to vector<256xf32>
    %7 = vector.shape_cast %6 : vector<256xf32> to vector<1x256xf32>
    %8 = arith.mulf %5, %5 : vector<4x256xf32>
    %cst_7 = arith.constant dense<0.000000e+00> : vector<256xf32>
    %9 = vector.multi_reduction <add>, %8, %cst_7 [0] : vector<4x256xf32> to vector<256xf32>
    %10 = vector.shape_cast %9 : vector<256xf32> to vector<1x256xf32>
    %c1_i32 = arith.constant 1 : i32
    %11 = tpu.dynamic_rotate %7 by %c1_i32 dim 1 : vector<1x256xf32>, i32 -> vector<1x256xf32>
    %12 = arith.mulf %11, %1 : vector<1x256xf32>
    %13 = arith.addf %7, %12 : vector<1x256xf32>
    %c255_i32 = arith.constant 255 : i32
    %14 = tpu.dynamic_rotate %7 by %c255_i32 dim 1 : vector<1x256xf32>, i32 -> vector<1x256xf32>
    %15 = arith.mulf %14, %2 : vector<1x256xf32>
    %16 = arith.addf %13, %15 : vector<1x256xf32>
    %c16_i32 = arith.constant 16 : i32
    %17 = tpu.dynamic_rotate %16 by %c16_i32 dim 1 : vector<1x256xf32>, i32 -> vector<1x256xf32>
    %18 = arith.mulf %17, %3 : vector<1x256xf32>
    %19 = arith.addf %16, %18 : vector<1x256xf32>
    %c240_i32 = arith.constant 240 : i32
    %20 = tpu.dynamic_rotate %16 by %c240_i32 dim 1 : vector<1x256xf32>, i32 -> vector<1x256xf32>
    %21 = arith.mulf %20, %4 : vector<1x256xf32>
    %22 = arith.addf %19, %21 : vector<1x256xf32>
    %23 = arith.mulf %22, %0 : vector<1x256xf32>
    %c1_i32_8 = arith.constant 1 : i32
    %24 = tpu.dynamic_rotate %10 by %c1_i32_8 dim 1 : vector<1x256xf32>, i32 -> vector<1x256xf32>
    %25 = arith.mulf %24, %1 : vector<1x256xf32>
    %26 = arith.addf %10, %25 : vector<1x256xf32>
    %c255_i32_9 = arith.constant 255 : i32
    %27 = tpu.dynamic_rotate %10 by %c255_i32_9 dim 1 : vector<1x256xf32>, i32 -> vector<1x256xf32>
    %28 = arith.mulf %27, %2 : vector<1x256xf32>
    %29 = arith.addf %26, %28 : vector<1x256xf32>
    %c16_i32_10 = arith.constant 16 : i32
    %30 = tpu.dynamic_rotate %29 by %c16_i32_10 dim 1 : vector<1x256xf32>, i32 -> vector<1x256xf32>
    %31 = arith.mulf %30, %3 : vector<1x256xf32>
    %32 = arith.addf %29, %31 : vector<1x256xf32>
    %c240_i32_11 = arith.constant 240 : i32
    %33 = tpu.dynamic_rotate %29 by %c240_i32_11 dim 1 : vector<1x256xf32>, i32 -> vector<1x256xf32>
    %34 = arith.mulf %33, %4 : vector<1x256xf32>
    %35 = arith.addf %32, %34 : vector<1x256xf32>
    %36 = arith.mulf %35, %0 : vector<1x256xf32>
    %37 = arith.mulf %23, %23 : vector<1x256xf32>
    %38 = arith.subf %36, %37 : vector<1x256xf32>
    %c0_12 = arith.constant 0 : index
    %39 = memref.load %arg2[%c0_12] : memref<44xf32, #tpu.memory_space<smem>>
    %40 = vector.broadcast %39 : f32 to vector<1x256xf32>
    %41 = arith.mulf %40, %38 : vector<1x256xf32>
    %c4_13 = arith.constant 4 : index
    %42 = memref.load %arg2[%c4_13] : memref<44xf32, #tpu.memory_space<smem>>
    %43 = vector.broadcast %42 : f32 to vector<1x256xf32>
    %44 = arith.addf %41, %43 : vector<1x256xf32>
    %cst_14 = arith.constant 0.000000e+00 : f32
    %45 = vector.broadcast %cst_14 : f32 to vector<1x256xf32>
    %46 = arith.maximumf %44, %45 : vector<1x256xf32>
    %c1_15 = arith.constant 1 : index
    %47 = memref.load %arg2[%c1_15] : memref<44xf32, #tpu.memory_space<smem>>
    %48 = vector.broadcast %47 : f32 to vector<1x256xf32>
    %49 = arith.mulf %48, %38 : vector<1x256xf32>
    %c5 = arith.constant 5 : index
    %50 = memref.load %arg2[%c5] : memref<44xf32, #tpu.memory_space<smem>>
    %51 = vector.broadcast %50 : f32 to vector<1x256xf32>
    %52 = arith.addf %49, %51 : vector<1x256xf32>
    %cst_16 = arith.constant 0.000000e+00 : f32
    %53 = vector.broadcast %cst_16 : f32 to vector<1x256xf32>
    %54 = arith.maximumf %52, %53 : vector<1x256xf32>
    %c2_17 = arith.constant 2 : index
    %55 = memref.load %arg2[%c2_17] : memref<44xf32, #tpu.memory_space<smem>>
    %56 = vector.broadcast %55 : f32 to vector<1x256xf32>
    %57 = arith.mulf %56, %38 : vector<1x256xf32>
    %c6 = arith.constant 6 : index
    %58 = memref.load %arg2[%c6] : memref<44xf32, #tpu.memory_space<smem>>
    %59 = vector.broadcast %58 : f32 to vector<1x256xf32>
    %60 = arith.addf %57, %59 : vector<1x256xf32>
    %cst_18 = arith.constant 0.000000e+00 : f32
    %61 = vector.broadcast %cst_18 : f32 to vector<1x256xf32>
    %62 = arith.maximumf %60, %61 : vector<1x256xf32>
    %c3_19 = arith.constant 3 : index
    %63 = memref.load %arg2[%c3_19] : memref<44xf32, #tpu.memory_space<smem>>
    %64 = vector.broadcast %63 : f32 to vector<1x256xf32>
    %65 = arith.mulf %64, %38 : vector<1x256xf32>
    %c7 = arith.constant 7 : index
    %66 = memref.load %arg2[%c7] : memref<44xf32, #tpu.memory_space<smem>>
    %67 = vector.broadcast %66 : f32 to vector<1x256xf32>
    %68 = arith.addf %65, %67 : vector<1x256xf32>
    %cst_20 = arith.constant 0.000000e+00 : f32
    %69 = vector.broadcast %cst_20 : f32 to vector<1x256xf32>
    %70 = arith.maximumf %68, %69 : vector<1x256xf32>
    %c12 = arith.constant 12 : index
    %71 = memref.load %arg2[%c12] : memref<44xf32, #tpu.memory_space<smem>>
    %72 = vector.broadcast %71 : f32 to vector<1x256xf32>
    %73 = arith.mulf %72, %46 : vector<1x256xf32>
    %c13 = arith.constant 13 : index
    %74 = memref.load %arg2[%c13] : memref<44xf32, #tpu.memory_space<smem>>
    %75 = vector.broadcast %74 : f32 to vector<1x256xf32>
    %76 = arith.mulf %75, %54 : vector<1x256xf32>
    %77 = arith.addf %73, %76 : vector<1x256xf32>
    %c14 = arith.constant 14 : index
    %78 = memref.load %arg2[%c14] : memref<44xf32, #tpu.memory_space<smem>>
    %79 = vector.broadcast %78 : f32 to vector<1x256xf32>
    %80 = arith.mulf %79, %62 : vector<1x256xf32>
    %81 = arith.addf %77, %80 : vector<1x256xf32>
    %c15 = arith.constant 15 : index
    %82 = memref.load %arg2[%c15] : memref<44xf32, #tpu.memory_space<smem>>
    %83 = vector.broadcast %82 : f32 to vector<1x256xf32>
    %84 = arith.mulf %83, %70 : vector<1x256xf32>
    %85 = arith.addf %81, %84 : vector<1x256xf32>
    %c8 = arith.constant 8 : index
    %86 = memref.load %arg2[%c8] : memref<44xf32, #tpu.memory_space<smem>>
    %87 = vector.broadcast %86 : f32 to vector<1x256xf32>
    %88 = arith.addf %85, %87 : vector<1x256xf32>
    %cst_21 = arith.constant 0.000000e+00 : f32
    %89 = vector.broadcast %cst_21 : f32 to vector<1x256xf32>
    %90 = arith.maximumf %88, %89 : vector<1x256xf32>
    %c16 = arith.constant 16 : index
    %91 = memref.load %arg2[%c16] : memref<44xf32, #tpu.memory_space<smem>>
    %92 = vector.broadcast %91 : f32 to vector<1x256xf32>
    %93 = arith.mulf %92, %46 : vector<1x256xf32>
    %c17 = arith.constant 17 : index
    %94 = memref.load %arg2[%c17] : memref<44xf32, #tpu.memory_space<smem>>
    %95 = vector.broadcast %94 : f32 to vector<1x256xf32>
    %96 = arith.mulf %95, %54 : vector<1x256xf32>
    %97 = arith.addf %93, %96 : vector<1x256xf32>
    %c18 = arith.constant 18 : index
    %98 = memref.load %arg2[%c18] : memref<44xf32, #tpu.memory_space<smem>>
    %99 = vector.broadcast %98 : f32 to vector<1x256xf32>
    %100 = arith.mulf %99, %62 : vector<1x256xf32>
    %101 = arith.addf %97, %100 : vector<1x256xf32>
    %c19 = arith.constant 19 : index
    %102 = memref.load %arg2[%c19] : memref<44xf32, #tpu.memory_space<smem>>
    %103 = vector.broadcast %102 : f32 to vector<1x256xf32>
    %104 = arith.mulf %103, %70 : vector<1x256xf32>
    %105 = arith.addf %101, %104 : vector<1x256xf32>
    %c9 = arith.constant 9 : index
    %106 = memref.load %arg2[%c9] : memref<44xf32, #tpu.memory_space<smem>>
    %107 = vector.broadcast %106 : f32 to vector<1x256xf32>
    %108 = arith.addf %105, %107 : vector<1x256xf32>
    %cst_22 = arith.constant 0.000000e+00 : f32
    %109 = vector.broadcast %cst_22 : f32 to vector<1x256xf32>
    %110 = arith.maximumf %108, %109 : vector<1x256xf32>
    %c20 = arith.constant 20 : index
    %111 = memref.load %arg2[%c20] : memref<44xf32, #tpu.memory_space<smem>>
    %112 = vector.broadcast %111 : f32 to vector<1x256xf32>
    %113 = arith.mulf %112, %46 : vector<1x256xf32>
    %c21 = arith.constant 21 : index
    %114 = memref.load %arg2[%c21] : memref<44xf32, #tpu.memory_space<smem>>
    %115 = vector.broadcast %114 : f32 to vector<1x256xf32>
    %116 = arith.mulf %115, %54 : vector<1x256xf32>
    %117 = arith.addf %113, %116 : vector<1x256xf32>
    %c22 = arith.constant 22 : index
    %118 = memref.load %arg2[%c22] : memref<44xf32, #tpu.memory_space<smem>>
    %119 = vector.broadcast %118 : f32 to vector<1x256xf32>
    %120 = arith.mulf %119, %62 : vector<1x256xf32>
    %121 = arith.addf %117, %120 : vector<1x256xf32>
    %c23 = arith.constant 23 : index
    %122 = memref.load %arg2[%c23] : memref<44xf32, #tpu.memory_space<smem>>
    %123 = vector.broadcast %122 : f32 to vector<1x256xf32>
    %124 = arith.mulf %123, %70 : vector<1x256xf32>
    %125 = arith.addf %121, %124 : vector<1x256xf32>
    %c10 = arith.constant 10 : index
    %126 = memref.load %arg2[%c10] : memref<44xf32, #tpu.memory_space<smem>>
    %127 = vector.broadcast %126 : f32 to vector<1x256xf32>
    %128 = arith.addf %125, %127 : vector<1x256xf32>
    %cst_23 = arith.constant 0.000000e+00 : f32
    %129 = vector.broadcast %cst_23 : f32 to vector<1x256xf32>
    %130 = arith.maximumf %128, %129 : vector<1x256xf32>
    %c24 = arith.constant 24 : index
    %131 = memref.load %arg2[%c24] : memref<44xf32, #tpu.memory_space<smem>>
    %132 = vector.broadcast %131 : f32 to vector<1x256xf32>
    %133 = arith.mulf %132, %46 : vector<1x256xf32>
    %c25 = arith.constant 25 : index
    %134 = memref.load %arg2[%c25] : memref<44xf32, #tpu.memory_space<smem>>
    %135 = vector.broadcast %134 : f32 to vector<1x256xf32>
    %136 = arith.mulf %135, %54 : vector<1x256xf32>
    %137 = arith.addf %133, %136 : vector<1x256xf32>
    %c26 = arith.constant 26 : index
    %138 = memref.load %arg2[%c26] : memref<44xf32, #tpu.memory_space<smem>>
    %139 = vector.broadcast %138 : f32 to vector<1x256xf32>
    %140 = arith.mulf %139, %62 : vector<1x256xf32>
    %141 = arith.addf %137, %140 : vector<1x256xf32>
    %c27 = arith.constant 27 : index
    %142 = memref.load %arg2[%c27] : memref<44xf32, #tpu.memory_space<smem>>
    %143 = vector.broadcast %142 : f32 to vector<1x256xf32>
    %144 = arith.mulf %143, %70 : vector<1x256xf32>
    %145 = arith.addf %141, %144 : vector<1x256xf32>
    %c11 = arith.constant 11 : index
    %146 = memref.load %arg2[%c11] : memref<44xf32, #tpu.memory_space<smem>>
    %147 = vector.broadcast %146 : f32 to vector<1x256xf32>
    %148 = arith.addf %145, %147 : vector<1x256xf32>
    %cst_24 = arith.constant 0.000000e+00 : f32
    %149 = vector.broadcast %cst_24 : f32 to vector<1x256xf32>
    %150 = arith.maximumf %148, %149 : vector<1x256xf32>
    %c28 = arith.constant 28 : index
    %151 = memref.load %arg2[%c28] : memref<44xf32, #tpu.memory_space<smem>>
    %152 = vector.broadcast %151 : f32 to vector<1x256xf32>
    %153 = arith.mulf %152, %90 : vector<1x256xf32>
    %c29 = arith.constant 29 : index
    %154 = memref.load %arg2[%c29] : memref<44xf32, #tpu.memory_space<smem>>
    %155 = vector.broadcast %154 : f32 to vector<1x256xf32>
    %156 = arith.mulf %155, %110 : vector<1x256xf32>
    %157 = arith.addf %153, %156 : vector<1x256xf32>
    %c30 = arith.constant 30 : index
    %158 = memref.load %arg2[%c30] : memref<44xf32, #tpu.memory_space<smem>>
    %159 = vector.broadcast %158 : f32 to vector<1x256xf32>
    %160 = arith.mulf %159, %130 : vector<1x256xf32>
    %161 = arith.addf %157, %160 : vector<1x256xf32>
    %c31 = arith.constant 31 : index
    %162 = memref.load %arg2[%c31] : memref<44xf32, #tpu.memory_space<smem>>
    %163 = vector.broadcast %162 : f32 to vector<1x256xf32>
    %164 = arith.mulf %163, %150 : vector<1x256xf32>
    %165 = arith.addf %161, %164 : vector<1x256xf32>
    %c0_25 = arith.constant 0 : index
    %c0_26 = arith.constant 0 : index
    %166 = vector.load %arg0[%c0_25, %c0_26] : memref<8x256xf32, #tpu.memory_space<vmem>>, vector<1x256xf32>
    %167 = arith.subf %166, %23 : vector<1x256xf32>
    %168 = arith.mulf %165, %167 : vector<1x256xf32>
    %169 = arith.addf %168, %23 : vector<1x256xf32>
    %c0_27 = arith.constant 0 : index
    %c0_28 = arith.constant 0 : index
    %170 = vector.load %arg3[%c0_27, %c0_28] : memref<8x256xf32, #tpu.memory_space<vmem>>, vector<1x256xf32>
    tpu.vector_store %arg3[%c0_27, %c0_28], %169 {strides = array<i32>} : memref<8x256xf32, #tpu.memory_space<vmem>>, vector<1x256xf32>,
    %c32 = arith.constant 32 : index
    %171 = memref.load %arg2[%c32] : memref<44xf32, #tpu.memory_space<smem>>
    %172 = vector.broadcast %171 : f32 to vector<1x256xf32>
    %173 = arith.mulf %172, %90 : vector<1x256xf32>
    %c33 = arith.constant 33 : index
    %174 = memref.load %arg2[%c33] : memref<44xf32, #tpu.memory_space<smem>>
    %175 = vector.broadcast %174 : f32 to vector<1x256xf32>
    %176 = arith.mulf %175, %110 : vector<1x256xf32>
    %177 = arith.addf %173, %176 : vector<1x256xf32>
    %c34 = arith.constant 34 : index
    %178 = memref.load %arg2[%c34] : memref<44xf32, #tpu.memory_space<smem>>
    %179 = vector.broadcast %178 : f32 to vector<1x256xf32>
    %180 = arith.mulf %179, %130 : vector<1x256xf32>
    %181 = arith.addf %177, %180 : vector<1x256xf32>
    %c35 = arith.constant 35 : index
    %182 = memref.load %arg2[%c35] : memref<44xf32, #tpu.memory_space<smem>>
    %183 = vector.broadcast %182 : f32 to vector<1x256xf32>
    %184 = arith.mulf %183, %150 : vector<1x256xf32>
    %185 = arith.addf %181, %184 : vector<1x256xf32>
    %c1_29 = arith.constant 1 : index
    %c0_30 = arith.constant 0 : index
    %186 = vector.load %arg0[%c1_29, %c0_30] : memref<8x256xf32, #tpu.memory_space<vmem>>, vector<1x256xf32>
    %187 = arith.subf %186, %23 : vector<1x256xf32>
    %188 = arith.mulf %185, %187 : vector<1x256xf32>
    %189 = arith.addf %188, %23 : vector<1x256xf32>
    %c1_31 = arith.constant 1 : index
    %c0_32 = arith.constant 0 : index
    %190 = vector.load %arg3[%c1_31, %c0_32] : memref<8x256xf32, #tpu.memory_space<vmem>>, vector<1x256xf32>
    tpu.vector_store %arg3[%c1_31, %c0_32], %189 {strides = array<i32>} : memref<8x256xf32, #tpu.memory_space<vmem>>, vector<1x256xf32>,
    %c36 = arith.constant 36 : index
    %191 = memref.load %arg2[%c36] : memref<44xf32, #tpu.memory_space<smem>>
    %192 = vector.broadcast %191 : f32 to vector<1x256xf32>
    %193 = arith.mulf %192, %90 : vector<1x256xf32>
    %c37 = arith.constant 37 : index
    %194 = memref.load %arg2[%c37] : memref<44xf32, #tpu.memory_space<smem>>
    %195 = vector.broadcast %194 : f32 to vector<1x256xf32>
    %196 = arith.mulf %195, %110 : vector<1x256xf32>
    %197 = arith.addf %193, %196 : vector<1x256xf32>
    %c38 = arith.constant 38 : index
    %198 = memref.load %arg2[%c38] : memref<44xf32, #tpu.memory_space<smem>>
    %199 = vector.broadcast %198 : f32 to vector<1x256xf32>
    %200 = arith.mulf %199, %130 : vector<1x256xf32>
    %201 = arith.addf %197, %200 : vector<1x256xf32>
    %c39 = arith.constant 39 : index
    %202 = memref.load %arg2[%c39] : memref<44xf32, #tpu.memory_space<smem>>
    %203 = vector.broadcast %202 : f32 to vector<1x256xf32>
    %204 = arith.mulf %203, %150 : vector<1x256xf32>
    %205 = arith.addf %201, %204 : vector<1x256xf32>
    %c2_33 = arith.constant 2 : index
    %c0_34 = arith.constant 0 : index
    %206 = vector.load %arg0[%c2_33, %c0_34] : memref<8x256xf32, #tpu.memory_space<vmem>>, vector<1x256xf32>
    %207 = arith.subf %206, %23 : vector<1x256xf32>
    %208 = arith.mulf %205, %207 : vector<1x256xf32>
    %209 = arith.addf %208, %23 : vector<1x256xf32>
    %c2_35 = arith.constant 2 : index
    %c0_36 = arith.constant 0 : index
    %210 = vector.load %arg3[%c2_35, %c0_36] : memref<8x256xf32, #tpu.memory_space<vmem>>, vector<1x256xf32>
    tpu.vector_store %arg3[%c2_35, %c0_36], %209 {strides = array<i32>} : memref<8x256xf32, #tpu.memory_space<vmem>>, vector<1x256xf32>,
    %c40 = arith.constant 40 : index
    %211 = memref.load %arg2[%c40] : memref<44xf32, #tpu.memory_space<smem>>
    %212 = vector.broadcast %211 : f32 to vector<1x256xf32>
    %213 = arith.mulf %212, %90 : vector<1x256xf32>
    %c41 = arith.constant 41 : index
    %214 = memref.load %arg2[%c41] : memref<44xf32, #tpu.memory_space<smem>>
    %215 = vector.broadcast %214 : f32 to vector<1x256xf32>
    %216 = arith.mulf %215, %110 : vector<1x256xf32>
    %217 = arith.addf %213, %216 : vector<1x256xf32>
    %c42 = arith.constant 42 : index
    %218 = memref.load %arg2[%c42] : memref<44xf32, #tpu.memory_space<smem>>
    %219 = vector.broadcast %218 : f32 to vector<1x256xf32>
    %220 = arith.mulf %219, %130 : vector<1x256xf32>
    %221 = arith.addf %217, %220 : vector<1x256xf32>
    %c43 = arith.constant 43 : index
    %222 = memref.load %arg2[%c43] : memref<44xf32, #tpu.memory_space<smem>>
    %223 = vector.broadcast %222 : f32 to vector<1x256xf32>
    %224 = arith.mulf %223, %150 : vector<1x256xf32>
    %225 = arith.addf %221, %224 : vector<1x256xf32>
    %c3_37 = arith.constant 3 : index
    %c0_38 = arith.constant 0 : index
    %226 = vector.load %arg0[%c3_37, %c0_38] : memref<8x256xf32, #tpu.memory_space<vmem>>, vector<1x256xf32>
    %227 = arith.subf %226, %23 : vector<1x256xf32>
    %228 = arith.mulf %225, %227 : vector<1x256xf32>
    %229 = arith.addf %228, %23 : vector<1x256xf32>
    %c3_39 = arith.constant 3 : index
    %c0_40 = arith.constant 0 : index
    %230 = vector.load %arg3[%c3_39, %c0_40] : memref<8x256xf32, #tpu.memory_space<vmem>>, vector<1x256xf32>
    tpu.vector_store %arg3[%c3_39, %c0_40], %229 {strides = array<i32>} : memref<8x256xf32, #tpu.memory_space<vmem>>, vector<1x256xf32>,
    %c4_41 = arith.constant 4 : index
    %c0_42 = arith.constant 0 : index
    %231 = vector.load %arg0[%c4_41, %c0_42] : memref<8x256xf32, #tpu.memory_space<vmem>>, vector<4x256xf32>
    %cst_43 = arith.constant dense<0.000000e+00> : vector<256xf32>
    %232 = vector.multi_reduction <add>, %231, %cst_43 [0] : vector<4x256xf32> to vector<256xf32>
    %233 = vector.shape_cast %232 : vector<256xf32> to vector<1x256xf32>
    %234 = arith.mulf %231, %231 : vector<4x256xf32>
    %cst_44 = arith.constant dense<0.000000e+00> : vector<256xf32>
    %235 = vector.multi_reduction <add>, %234, %cst_44 [0] : vector<4x256xf32> to vector<256xf32>
    %236 = vector.shape_cast %235 : vector<256xf32> to vector<1x256xf32>
    %c1_i32_45 = arith.constant 1 : i32
    %237 = tpu.dynamic_rotate %233 by %c1_i32_45 dim 1 : vector<1x256xf32>, i32 -> vector<1x256xf32>
    %238 = arith.mulf %237, %1 : vector<1x256xf32>
    %239 = arith.addf %233, %238 : vector<1x256xf32>
    %c255_i32_46 = arith.constant 255 : i32
    %240 = tpu.dynamic_rotate %233 by %c255_i32_46 dim 1 : vector<1x256xf32>, i32 -> vector<1x256xf32>
    %241 = arith.mulf %240, %2 : vector<1x256xf32>
    %242 = arith.addf %239, %241 : vector<1x256xf32>
    %c16_i32_47 = arith.constant 16 : i32
    %243 = tpu.dynamic_rotate %242 by %c16_i32_47 dim 1 : vector<1x256xf32>, i32 -> vector<1x256xf32>
    %244 = arith.mulf %243, %3 : vector<1x256xf32>
    %245 = arith.addf %242, %244 : vector<1x256xf32>
    %c240_i32_48 = arith.constant 240 : i32
    %246 = tpu.dynamic_rotate %242 by %c240_i32_48 dim 1 : vector<1x256xf32>, i32 -> vector<1x256xf32>
    %247 = arith.mulf %246, %4 : vector<1x256xf32>
    %248 = arith.addf %245, %247 : vector<1x256xf32>
    %249 = arith.mulf %248, %0 : vector<1x256xf32>
    %c1_i32_49 = arith.constant 1 : i32
    %250 = tpu.dynamic_rotate %236 by %c1_i32_49 dim 1 : vector<1x256xf32>, i32 -> vector<1x256xf32>
    %251 = arith.mulf %250, %1 : vector<1x256xf32>
    %252 = arith.addf %236, %251 : vector<1x256xf32>
    %c255_i32_50 = arith.constant 255 : i32
    %253 = tpu.dynamic_rotate %236 by %c255_i32_50 dim 1 : vector<1x256xf32>, i32 -> vector<1x256xf32>
    %254 = arith.mulf %253, %2 : vector<1x256xf32>
    %255 = arith.addf %252, %254 : vector<1x256xf32>
    %c16_i32_51 = arith.constant 16 : i32
    %256 = tpu.dynamic_rotate %255 by %c16_i32_51 dim 1 : vector<1x256xf32>, i32 -> vector<1x256xf32>
    %257 = arith.mulf %256, %3 : vector<1x256xf32>
    %258 = arith.addf %255, %257 : vector<1x256xf32>
    %c240_i32_52 = arith.constant 240 : i32
    %259 = tpu.dynamic_rotate %255 by %c240_i32_52 dim 1 : vector<1x256xf32>, i32 -> vector<1x256xf32>
    %260 = arith.mulf %259, %4 : vector<1x256xf32>
    %261 = arith.addf %258, %260 : vector<1x256xf32>
    %262 = arith.mulf %261, %0 : vector<1x256xf32>
    %263 = arith.mulf %249, %249 : vector<1x256xf32>
    %264 = arith.subf %262, %263 : vector<1x256xf32>
    %c0_53 = arith.constant 0 : index
    %265 = memref.load %arg2[%c0_53] : memref<44xf32, #tpu.memory_space<smem>>
    %266 = vector.broadcast %265 : f32 to vector<1x256xf32>
    %267 = arith.mulf %266, %264 : vector<1x256xf32>
    %c4_54 = arith.constant 4 : index
    %268 = memref.load %arg2[%c4_54] : memref<44xf32, #tpu.memory_space<smem>>
    %269 = vector.broadcast %268 : f32 to vector<1x256xf32>
    %270 = arith.addf %267, %269 : vector<1x256xf32>
    %cst_55 = arith.constant 0.000000e+00 : f32
    %271 = vector.broadcast %cst_55 : f32 to vector<1x256xf32>
    %272 = arith.maximumf %270, %271 : vector<1x256xf32>
    %c1_56 = arith.constant 1 : index
    %273 = memref.load %arg2[%c1_56] : memref<44xf32, #tpu.memory_space<smem>>
    %274 = vector.broadcast %273 : f32 to vector<1x256xf32>
    %275 = arith.mulf %274, %264 : vector<1x256xf32>
    %c5_57 = arith.constant 5 : index
    %276 = memref.load %arg2[%c5_57] : memref<44xf32, #tpu.memory_space<smem>>
    %277 = vector.broadcast %276 : f32 to vector<1x256xf32>
    %278 = arith.addf %275, %277 : vector<1x256xf32>
    %cst_58 = arith.constant 0.000000e+00 : f32
    %279 = vector.broadcast %cst_58 : f32 to vector<1x256xf32>
    %280 = arith.maximumf %278, %279 : vector<1x256xf32>
    %c2_59 = arith.constant 2 : index
    %281 = memref.load %arg2[%c2_59] : memref<44xf32, #tpu.memory_space<smem>>
    %282 = vector.broadcast %281 : f32 to vector<1x256xf32>
    %283 = arith.mulf %282, %264 : vector<1x256xf32>
    %c6_60 = arith.constant 6 : index
    %284 = memref.load %arg2[%c6_60] : memref<44xf32, #tpu.memory_space<smem>>
    %285 = vector.broadcast %284 : f32 to vector<1x256xf32>
    %286 = arith.addf %283, %285 : vector<1x256xf32>
    %cst_61 = arith.constant 0.000000e+00 : f32
    %287 = vector.broadcast %cst_61 : f32 to vector<1x256xf32>
    %288 = arith.maximumf %286, %287 : vector<1x256xf32>
    %c3_62 = arith.constant 3 : index
    %289 = memref.load %arg2[%c3_62] : memref<44xf32, #tpu.memory_space<smem>>
    %290 = vector.broadcast %289 : f32 to vector<1x256xf32>
    %291 = arith.mulf %290, %264 : vector<1x256xf32>
    %c7_63 = arith.constant 7 : index
    %292 = memref.load %arg2[%c7_63] : memref<44xf32, #tpu.memory_space<smem>>
    %293 = vector.broadcast %292 : f32 to vector<1x256xf32>
    %294 = arith.addf %291, %293 : vector<1x256xf32>
    %cst_64 = arith.constant 0.000000e+00 : f32
    %295 = vector.broadcast %cst_64 : f32 to vector<1x256xf32>
    %296 = arith.maximumf %294, %295 : vector<1x256xf32>
    %c12_65 = arith.constant 12 : index
    %297 = memref.load %arg2[%c12_65] : memref<44xf32, #tpu.memory_space<smem>>
    %298 = vector.broadcast %297 : f32 to vector<1x256xf32>
    %299 = arith.mulf %298, %272 : vector<1x256xf32>
    %c13_66 = arith.constant 13 : index
    %300 = memref.load %arg2[%c13_66] : memref<44xf32, #tpu.memory_space<smem>>
    %301 = vector.broadcast %300 : f32 to vector<1x256xf32>
    %302 = arith.mulf %301, %280 : vector<1x256xf32>
    %303 = arith.addf %299, %302 : vector<1x256xf32>
    %c14_67 = arith.constant 14 : index
    %304 = memref.load %arg2[%c14_67] : memref<44xf32, #tpu.memory_space<smem>>
    %305 = vector.broadcast %304 : f32 to vector<1x256xf32>
    %306 = arith.mulf %305, %288 : vector<1x256xf32>
    %307 = arith.addf %303, %306 : vector<1x256xf32>
    %c15_68 = arith.constant 15 : index
    %308 = memref.load %arg2[%c15_68] : memref<44xf32, #tpu.memory_space<smem>>
    %309 = vector.broadcast %308 : f32 to vector<1x256xf32>
    %310 = arith.mulf %309, %296 : vector<1x256xf32>
    %311 = arith.addf %307, %310 : vector<1x256xf32>
    %c8_69 = arith.constant 8 : index
    %312 = memref.load %arg2[%c8_69] : memref<44xf32, #tpu.memory_space<smem>>
    %313 = vector.broadcast %312 : f32 to vector<1x256xf32>
    %314 = arith.addf %311, %313 : vector<1x256xf32>
    %cst_70 = arith.constant 0.000000e+00 : f32
    %315 = vector.broadcast %cst_70 : f32 to vector<1x256xf32>
    %316 = arith.maximumf %314, %315 : vector<1x256xf32>
    %c16_71 = arith.constant 16 : index
    %317 = memref.load %arg2[%c16_71] : memref<44xf32, #tpu.memory_space<smem>>
    %318 = vector.broadcast %317 : f32 to vector<1x256xf32>
    %319 = arith.mulf %318, %272 : vector<1x256xf32>
    %c17_72 = arith.constant 17 : index
    %320 = memref.load %arg2[%c17_72] : memref<44xf32, #tpu.memory_space<smem>>
    %321 = vector.broadcast %320 : f32 to vector<1x256xf32>
    %322 = arith.mulf %321, %280 : vector<1x256xf32>
    %323 = arith.addf %319, %322 : vector<1x256xf32>
    %c18_73 = arith.constant 18 : index
    %324 = memref.load %arg2[%c18_73] : memref<44xf32, #tpu.memory_space<smem>>
    %325 = vector.broadcast %324 : f32 to vector<1x256xf32>
    %326 = arith.mulf %325, %288 : vector<1x256xf32>
    %327 = arith.addf %323, %326 : vector<1x256xf32>
    %c19_74 = arith.constant 19 : index
    %328 = memref.load %arg2[%c19_74] : memref<44xf32, #tpu.memory_space<smem>>
    %329 = vector.broadcast %328 : f32 to vector<1x256xf32>
    %330 = arith.mulf %329, %296 : vector<1x256xf32>
    %331 = arith.addf %327, %330 : vector<1x256xf32>
    %c9_75 = arith.constant 9 : index
    %332 = memref.load %arg2[%c9_75] : memref<44xf32, #tpu.memory_space<smem>>
    %333 = vector.broadcast %332 : f32 to vector<1x256xf32>
    %334 = arith.addf %331, %333 : vector<1x256xf32>
    %cst_76 = arith.constant 0.000000e+00 : f32
    %335 = vector.broadcast %cst_76 : f32 to vector<1x256xf32>
    %336 = arith.maximumf %334, %335 : vector<1x256xf32>
    %c20_77 = arith.constant 20 : index
    %337 = memref.load %arg2[%c20_77] : memref<44xf32, #tpu.memory_space<smem>>
    %338 = vector.broadcast %337 : f32 to vector<1x256xf32>
    %339 = arith.mulf %338, %272 : vector<1x256xf32>
    %c21_78 = arith.constant 21 : index
    %340 = memref.load %arg2[%c21_78] : memref<44xf32, #tpu.memory_space<smem>>
    %341 = vector.broadcast %340 : f32 to vector<1x256xf32>
    %342 = arith.mulf %341, %280 : vector<1x256xf32>
    %343 = arith.addf %339, %342 : vector<1x256xf32>
    %c22_79 = arith.constant 22 : index
    %344 = memref.load %arg2[%c22_79] : memref<44xf32, #tpu.memory_space<smem>>
    %345 = vector.broadcast %344 : f32 to vector<1x256xf32>
    %346 = arith.mulf %345, %288 : vector<1x256xf32>
    %347 = arith.addf %343, %346 : vector<1x256xf32>
    %c23_80 = arith.constant 23 : index
    %348 = memref.load %arg2[%c23_80] : memref<44xf32, #tpu.memory_space<smem>>
    %349 = vector.broadcast %348 : f32 to vector<1x256xf32>
    %350 = arith.mulf %349, %296 : vector<1x256xf32>
    %351 = arith.addf %347, %350 : vector<1x256xf32>
    %c10_81 = arith.constant 10 : index
    %352 = memref.load %arg2[%c10_81] : memref<44xf32, #tpu.memory_space<smem>>
    %353 = vector.broadcast %352 : f32 to vector<1x256xf32>
    %354 = arith.addf %351, %353 : vector<1x256xf32>
    %cst_82 = arith.constant 0.000000e+00 : f32
    %355 = vector.broadcast %cst_82 : f32 to vector<1x256xf32>
    %356 = arith.maximumf %354, %355 : vector<1x256xf32>
    %c24_83 = arith.constant 24 : index
    %357 = memref.load %arg2[%c24_83] : memref<44xf32, #tpu.memory_space<smem>>
    %358 = vector.broadcast %357 : f32 to vector<1x256xf32>
    %359 = arith.mulf %358, %272 : vector<1x256xf32>
    %c25_84 = arith.constant 25 : index
    %360 = memref.load %arg2[%c25_84] : memref<44xf32, #tpu.memory_space<smem>>
    %361 = vector.broadcast %360 : f32 to vector<1x256xf32>
    %362 = arith.mulf %361, %280 : vector<1x256xf32>
    %363 = arith.addf %359, %362 : vector<1x256xf32>
    %c26_85 = arith.constant 26 : index
    %364 = memref.load %arg2[%c26_85] : memref<44xf32, #tpu.memory_space<smem>>
    %365 = vector.broadcast %364 : f32 to vector<1x256xf32>
    %366 = arith.mulf %365, %288 : vector<1x256xf32>
    %367 = arith.addf %363, %366 : vector<1x256xf32>
    %c27_86 = arith.constant 27 : index
    %368 = memref.load %arg2[%c27_86] : memref<44xf32, #tpu.memory_space<smem>>
    %369 = vector.broadcast %368 : f32 to vector<1x256xf32>
    %370 = arith.mulf %369, %296 : vector<1x256xf32>
    %371 = arith.addf %367, %370 : vector<1x256xf32>
    %c11_87 = arith.constant 11 : index
    %372 = memref.load %arg2[%c11_87] : memref<44xf32, #tpu.memory_space<smem>>
    %373 = vector.broadcast %372 : f32 to vector<1x256xf32>
    %374 = arith.addf %371, %373 : vector<1x256xf32>
    %cst_88 = arith.constant 0.000000e+00 : f32
    %375 = vector.broadcast %cst_88 : f32 to vector<1x256xf32>
    %376 = arith.maximumf %374, %375 : vector<1x256xf32>
    %c28_89 = arith.constant 28 : index
    %377 = memref.load %arg2[%c28_89] : memref<44xf32, #tpu.memory_space<smem>>
    %378 = vector.broadcast %377 : f32 to vector<1x256xf32>
    %379 = arith.mulf %378, %316 : vector<1x256xf32>
    %c29_90 = arith.constant 29 : index
    %380 = memref.load %arg2[%c29_90] : memref<44xf32, #tpu.memory_space<smem>>
    %381 = vector.broadcast %380 : f32 to vector<1x256xf32>
    %382 = arith.mulf %381, %336 : vector<1x256xf32>
    %383 = arith.addf %379, %382 : vector<1x256xf32>
    %c30_91 = arith.constant 30 : index
    %384 = memref.load %arg2[%c30_91] : memref<44xf32, #tpu.memory_space<smem>>
    %385 = vector.broadcast %384 : f32 to vector<1x256xf32>
    %386 = arith.mulf %385, %356 : vector<1x256xf32>
    %387 = arith.addf %383, %386 : vector<1x256xf32>
    %c31_92 = arith.constant 31 : index
    %388 = memref.load %arg2[%c31_92] : memref<44xf32, #tpu.memory_space<smem>>
    %389 = vector.broadcast %388 : f32 to vector<1x256xf32>
    %390 = arith.mulf %389, %376 : vector<1x256xf32>
    %391 = arith.addf %387, %390 : vector<1x256xf32>
    %c4_93 = arith.constant 4 : index
    %c0_94 = arith.constant 0 : index
    %392 = vector.load %arg0[%c4_93, %c0_94] : memref<8x256xf32, #tpu.memory_space<vmem>>, vector<1x256xf32>
    %393 = arith.subf %392, %249 : vector<1x256xf32>
    %394 = arith.mulf %391, %393 : vector<1x256xf32>
    %395 = arith.addf %394, %249 : vector<1x256xf32>
    %c4_95 = arith.constant 4 : index
    %c0_96 = arith.constant 0 : index
    %396 = vector.load %arg3[%c4_95, %c0_96] : memref<8x256xf32, #tpu.memory_space<vmem>>, vector<1x256xf32>
    tpu.vector_store %arg3[%c4_95, %c0_96], %395 {strides = array<i32>} : memref<8x256xf32, #tpu.memory_space<vmem>>, vector<1x256xf32>,
    %c32_97 = arith.constant 32 : index
    %397 = memref.load %arg2[%c32_97] : memref<44xf32, #tpu.memory_space<smem>>
    %398 = vector.broadcast %397 : f32 to vector<1x256xf32>
    %399 = arith.mulf %398, %316 : vector<1x256xf32>
    %c33_98 = arith.constant 33 : index
    %400 = memref.load %arg2[%c33_98] : memref<44xf32, #tpu.memory_space<smem>>
    %401 = vector.broadcast %400 : f32 to vector<1x256xf32>
    %402 = arith.mulf %401, %336 : vector<1x256xf32>
    %403 = arith.addf %399, %402 : vector<1x256xf32>
    %c34_99 = arith.constant 34 : index
    %404 = memref.load %arg2[%c34_99] : memref<44xf32, #tpu.memory_space<smem>>
    %405 = vector.broadcast %404 : f32 to vector<1x256xf32>
    %406 = arith.mulf %405, %356 : vector<1x256xf32>
    %407 = arith.addf %403, %406 : vector<1x256xf32>
    %c35_100 = arith.constant 35 : index
    %408 = memref.load %arg2[%c35_100] : memref<44xf32, #tpu.memory_space<smem>>
    %409 = vector.broadcast %408 : f32 to vector<1x256xf32>
    %410 = arith.mulf %409, %376 : vector<1x256xf32>
    %411 = arith.addf %407, %410 : vector<1x256xf32>
    %c5_101 = arith.constant 5 : index
    %c0_102 = arith.constant 0 : index
    %412 = vector.load %arg0[%c5_101, %c0_102] : memref<8x256xf32, #tpu.memory_space<vmem>>, vector<1x256xf32>
    %413 = arith.subf %412, %249 : vector<1x256xf32>
    %414 = arith.mulf %411, %413 : vector<1x256xf32>
    %415 = arith.addf %414, %249 : vector<1x256xf32>
    %c5_103 = arith.constant 5 : index
    %c0_104 = arith.constant 0 : index
    %416 = vector.load %arg3[%c5_103, %c0_104] : memref<8x256xf32, #tpu.memory_space<vmem>>, vector<1x256xf32>
    tpu.vector_store %arg3[%c5_103, %c0_104], %415 {strides = array<i32>} : memref<8x256xf32, #tpu.memory_space<vmem>>, vector<1x256xf32>,
    %c36_105 = arith.constant 36 : index
    %417 = memref.load %arg2[%c36_105] : memref<44xf32, #tpu.memory_space<smem>>
    %418 = vector.broadcast %417 : f32 to vector<1x256xf32>
    %419 = arith.mulf %418, %316 : vector<1x256xf32>
    %c37_106 = arith.constant 37 : index
    %420 = memref.load %arg2[%c37_106] : memref<44xf32, #tpu.memory_space<smem>>
    %421 = vector.broadcast %420 : f32 to vector<1x256xf32>
    %422 = arith.mulf %421, %336 : vector<1x256xf32>
    %423 = arith.addf %419, %422 : vector<1x256xf32>
    %c38_107 = arith.constant 38 : index
    %424 = memref.load %arg2[%c38_107] : memref<44xf32, #tpu.memory_space<smem>>
    %425 = vector.broadcast %424 : f32 to vector<1x256xf32>
    %426 = arith.mulf %425, %356 : vector<1x256xf32>
    %427 = arith.addf %423, %426 : vector<1x256xf32>
    %c39_108 = arith.constant 39 : index
    %428 = memref.load %arg2[%c39_108] : memref<44xf32, #tpu.memory_space<smem>>
    %429 = vector.broadcast %428 : f32 to vector<1x256xf32>
    %430 = arith.mulf %429, %376 : vector<1x256xf32>
    %431 = arith.addf %427, %430 : vector<1x256xf32>
    %c6_109 = arith.constant 6 : index
    %c0_110 = arith.constant 0 : index
    %432 = vector.load %arg0[%c6_109, %c0_110] : memref<8x256xf32, #tpu.memory_space<vmem>>, vector<1x256xf32>
    %433 = arith.subf %432, %249 : vector<1x256xf32>
    %434 = arith.mulf %431, %433 : vector<1x256xf32>
    %435 = arith.addf %434, %249 : vector<1x256xf32>
    %c6_111 = arith.constant 6 : index
    %c0_112 = arith.constant 0 : index
    %436 = vector.load %arg3[%c6_111, %c0_112] : memref<8x256xf32, #tpu.memory_space<vmem>>, vector<1x256xf32>
    tpu.vector_store %arg3[%c6_111, %c0_112], %435 {strides = array<i32>} : memref<8x256xf32, #tpu.memory_space<vmem>>, vector<1x256xf32>,
    %c40_113 = arith.constant 40 : index
    %437 = memref.load %arg2[%c40_113] : memref<44xf32, #tpu.memory_space<smem>>
    %438 = vector.broadcast %437 : f32 to vector<1x256xf32>
    %439 = arith.mulf %438, %316 : vector<1x256xf32>
    %c41_114 = arith.constant 41 : index
    %440 = memref.load %arg2[%c41_114] : memref<44xf32, #tpu.memory_space<smem>>
    %441 = vector.broadcast %440 : f32 to vector<1x256xf32>
    %442 = arith.mulf %441, %336 : vector<1x256xf32>
    %443 = arith.addf %439, %442 : vector<1x256xf32>
    %c42_115 = arith.constant 42 : index
    %444 = memref.load %arg2[%c42_115] : memref<44xf32, #tpu.memory_space<smem>>
    %445 = vector.broadcast %444 : f32 to vector<1x256xf32>
    %446 = arith.mulf %445, %356 : vector<1x256xf32>
    %447 = arith.addf %443, %446 : vector<1x256xf32>
    %c43_116 = arith.constant 43 : index
    %448 = memref.load %arg2[%c43_116] : memref<44xf32, #tpu.memory_space<smem>>
    %449 = vector.broadcast %448 : f32 to vector<1x256xf32>
    %450 = arith.mulf %449, %376 : vector<1x256xf32>
    %451 = arith.addf %447, %450 : vector<1x256xf32>
    %c7_117 = arith.constant 7 : index
    %c0_118 = arith.constant 0 : index
    %452 = vector.load %arg0[%c7_117, %c0_118] : memref<8x256xf32, #tpu.memory_space<vmem>>, vector<1x256xf32>
    %453 = arith.subf %452, %249 : vector<1x256xf32>
    %454 = arith.mulf %451, %453 : vector<1x256xf32>
    %455 = arith.addf %454, %249 : vector<1x256xf32>
    %c7_119 = arith.constant 7 : index
    %c0_120 = arith.constant 0 : index
    %456 = vector.load %arg3[%c7_119, %c0_120] : memref<8x256xf32, #tpu.memory_space<vmem>>, vector<1x256xf32>
    tpu.vector_store %arg3[%c7_119, %c0_120], %455 {strides = array<i32>} : memref<8x256xf32, #tpu.memory_space<vmem>>, vector<1x256xf32>,
    return
  }
}

</mosaic_0001>

<llo_original>
// kernel: conv_guided_filter.1
$region0: #{conv_guided_filter.1}
  #allocation0 [shape = 'u32[]', space=smem, size = 0x4, offset = 0x4, fixed_abs, tag = 'smem constant byte address 0x4 - core index']
  #allocation1 [shape = 'u32[144,128]{1,0:T(1,128)}', space=vmem, size = 0x12000, scoped, tag = 'internal scratch']
  %s0 = inlined_call_operand.vmem [shape: f32[8,256], index: 0, kind: input, shape index: {}]
  %s1 = inlined_call_operand.vmem [shape: f32[5,256], index: 1, kind: input, shape index: {}]
  %s2 = inlined_call_operand.vmem [shape: f32[44], index: 2, kind: input, shape index: {}]
  %s3 = inlined_call_operand.vmem [shape: f32[8,256], index: 3, kind: output, shape index: {}]
  %s4 = sld [smem:[#allocation0]]
  $region26: #{conv_guided_filter.1} parent=0
    _
  %s6 = ssub.s32 1, %s4
  %s7 = scalar_select 0, %s6, %s4
  $region1: #{conv_guided_filter.1} parent=0
    #allocation2 [shape = 'u8[512]{0}', space=smem, size = 0x200, scoped, tag = 'input window, operand 2, single buffered']
    #allocation3 [shape = 's32[1]{0}', space=sflag, size = 0x4, scoped, tag = 'scoped memory for conv_guided_filter.1']
    %8 = vsyncpa [#allocation3], 0
    // Predicated region
    $region2: #{conv_guided_filter.1} parent=1 // pred_check
      _
    $region3: #{conv_guided_filter.1} parent=1 // pred_check_branch
      %10 = sbr.rel (0) target = $region5
    $region4: #{conv_guided_filter.1} parent=1 // pred_region
      _
    $region5: #{conv_guided_filter.1} parent=1 // pred_fallthru
      _
    // Predicated region
    $region6: #{conv_guided_filter.1} parent=1 // pred_check
      _
    $region7: #{conv_guided_filter.1} parent=1 // pred_check_branch
      %12 = sbr.rel (0) target = $region9
    $region8: #{conv_guided_filter.1} parent=1 // pred_region
      _
    $region9: #{conv_guided_filter.1} parent=1 // pred_fallthru
      _
    // Predicated region
    $region10: #{conv_guided_filter.1} parent=1 // pred_check
      _
    $region11: #{conv_guided_filter.1} parent=1 // pred_check_branch
      %14 = sbr.rel (0) target = $region13
    $region12: #{conv_guided_filter.1} parent=1 // pred_region
      %s16 = ssub.s32 16, 16
      %17 = vsyncadd [#allocation3], %s16
      %s19 = sshll.u32 %s2, 4
      %s20 = int_to_ptr.vmem [resolvable:$true] %s19
      %22 = dma.vmem_to_smem %s20, 16, [#allocation2], [#allocation3]
    $region13: #{conv_guided_filter.1} parent=1 // pred_fallthru
      _
    // Predicated region
    $region14: #{conv_guided_filter.1} parent=1 // pred_check
      _
    $region15: #{conv_guided_filter.1} parent=1 // pred_check_branch
      %24 = sbr.rel (0) target = $region17
    $region16: #{conv_guided_filter.1} parent=1 // pred_region
      %25 = dma.done [#allocation3], 16
    $region17: #{conv_guided_filter.1} parent=1 // pred_fallthru
      _
    %26 = sfence
    %v27 = vld [vmem:[%s1] ss:$8 sm:$0x3]
    %s28 = scalar_lea.vmem %s1, 1
    %v29 = vld [vmem:[%s28] ss:$8 sm:$0x3]
    %s30 = scalar_lea.vmem %s1, 2
    %v31 = vld [vmem:[%s30] ss:$8 sm:$0x3]
    %s32 = scalar_lea.vmem %s1, 3
    %v33 = vld [vmem:[%s32] ss:$8 sm:$0x3]
    %s34 = scalar_lea.vmem %s1, 4
    %v35 = vld [vmem:[%s34] ss:$8 sm:$0x3]
    %v36 = vld [vmem:[%s0] sm:$0xf]
    %v37 = vld [vmem:[%s0 + $0x8] sm:$0xf]
    %vm38 = vcmask 1043456
    %v39 = vsel %vm38, %v36, 0.0
    %v40 = vrot.slane %v39, 4
    %v41 = vadd.f32 %v39, %v40
    %v42 = vrot.slane %v41, 2
    %v43 = vadd.f32 %v41, %v42
    %v44 = vrot.slane %v43, 1
    %v45 = vadd.f32 %v43, %v44
    %v46 = vsel %vm38, %v37, 0.0
    %v47 = vrot.slane %v46, 4
    %v48 = vadd.f32 %v46, %v47
    %v49 = vrot.slane %v48, 2
    %v50 = vadd.f32 %v48, %v49
    %v51 = vrot.slane %v50, 1
    %v52 = vadd.f32 %v50, %v51
    %v53 = vmul.f32 %v36, %v36
    %v54 = vmul.f32 %v37, %v37
    %v55 = vsel %vm38, %v53, 0.0
    %v56 = vrot.slane %v55, 4
    %v57 = vadd.f32 %v55, %v56
    %v58 = vrot.slane %v57, 2
    %v59 = vadd.f32 %v57, %v58
    %v60 = vrot.slane %v59, 1
    %v61 = vadd.f32 %v59, %v60
    %v62 = vsel %vm38, %v54, 0.0
    %v63 = vrot.slane %v62, 4
    %v64 = vadd.f32 %v62, %v63
    %v65 = vrot.slane %v64, 2
    %v66 = vadd.f32 %v64, %v65
    %v67 = vrot.slane %v66, 1
    %v68 = vadd.f32 %v66, %v67
    %69 = vrot.lane.b32.xlu0 %v45, 1
    %v70 = vpop.permute.xlu0 %69
    %71 = vrot.lane.b32.xlu0 %v52, 1
    %v72 = vpop.permute.xlu0 %71
    %v73 = vlaneseq
    %v74 = vand.u32 %v73, 127
    %vm75 = vcmp.lt.s32.totalorder %v74, 1
    %v76 = vsel %vm75, %v70, %v72
    %v77 = vsel %vm75, %v72, %v70
    %v79 = vlaneseq
    %v80 = vshrl.u32 %v79, 7
    %v81 = vsub.s32 0, %v80
    %v82 = vrot.slane %v29, %v81
    %v83 = vlaneseq
    %v84 = vshrl.u32 %v83, 7
    %v85 = vsub.s32 1, %v84
    %v86 = vrot.slane %v29, %v85
    %v89 = vmul.f32 %v77, %v82
    %v90 = vmul.f32 %v76, %v86
    %v91 = vadd.f32 %v45, %v89
    %v92 = vadd.f32 %v52, %v90
    %93 = vrot.lane.b32.xlu0 %v45, 127
    %v94 = vpop.permute.xlu0 %93
    %95 = vrot.lane.b32.xlu0 %v52, 127
    %v96 = vpop.permute.xlu0 %95
    %vm97 = vcmp.lt.s32.totalorder %v74, 127
    %v98 = vsel %vm97, %v94, %v96
    %v99 = vsel %vm97, %v96, %v94
    %v101 = vlaneseq
    %v102 = vshrl.u32 %v101, 7
    %v103 = vsub.s32 0, %v102
    %v104 = vrot.slane %v31, %v103
    %v105 = vlaneseq
    %v106 = vshrl.u32 %v105, 7
    %v107 = vsub.s32 1, %v106
    %v108 = vrot.slane %v31, %v107
    %v111 = vmul.f32 %v98, %v104
    %v112 = vmul.f32 %v99, %v108
    %v113 = vadd.f32 %v91, %v111
    %v114 = vadd.f32 %v92, %v112
    %115 = vrot.lane.b32.xlu0 %v113, 16
    %v116 = vpop.permute.xlu0 %115
    %117 = vrot.lane.b32.xlu0 %v114, 16
    %v118 = vpop.permute.xlu0 %117
    %vm119 = vcmp.lt.s32.totalorder %v74, 16
    %v120 = vsel %vm119, %v116, %v118
    %v121 = vsel %vm119, %v118, %v116
    %v123 = vlaneseq
    %v124 = vshrl.u32 %v123, 7
    %v125 = vsub.s32 0, %v124
    %v126 = vrot.slane %v33, %v125
    %v127 = vlaneseq
    %v128 = vshrl.u32 %v127, 7
    %v129 = vsub.s32 1, %v128
    %v130 = vrot.slane %v33, %v129
    %v133 = vmul.f32 %v121, %v126
    %v134 = vmul.f32 %v120, %v130
    %v135 = vadd.f32 %v113, %v133
    %v136 = vadd.f32 %v114, %v134
    %137 = vrot.lane.b32.xlu0 %v113, 112
    %v138 = vpop.permute.xlu0 %137
    %139 = vrot.lane.b32.xlu0 %v114, 112
    %v140 = vpop.permute.xlu0 %139
    %vm141 = vcmp.lt.s32.totalorder %v74, 112
    %v142 = vsel %vm141, %v138, %v140
    %v143 = vsel %vm141, %v140, %v138
    %v145 = vlaneseq
    %v146 = vshrl.u32 %v145, 7
    %v147 = vsub.s32 0, %v146
    %v148 = vrot.slane %v35, %v147
    %v149 = vlaneseq
    %v150 = vshrl.u32 %v149, 7
    %v151 = vsub.s32 1, %v150
    %v152 = vrot.slane %v35, %v151
    %v155 = vmul.f32 %v142, %v148
    %v156 = vmul.f32 %v143, %v152
    %v157 = vadd.f32 %v135, %v155
    %v158 = vadd.f32 %v136, %v156
    %v160 = vlaneseq
    %v161 = vshrl.u32 %v160, 7
    %v162 = vsub.s32 0, %v161
    %v163 = vrot.slane %v27, %v162
    %v164 = vlaneseq
    %v165 = vshrl.u32 %v164, 7
    %v166 = vsub.s32 1, %v165
    %v167 = vrot.slane %v27, %v166
    %v170 = vmul.f32 %v157, %v163
    %v171 = vmul.f32 %v158, %v167
    %172 = vrot.lane.b32.xlu0 %v61, 1
    %v173 = vpop.permute.xlu0 %172
    %174 = vrot.lane.b32.xlu0 %v68, 1
    %v175 = vpop.permute.xlu0 %174
    %v176 = vsel %vm75, %v173, %v175
    %v177 = vsel %vm75, %v175, %v173
    %v178 = vmul.f32 %v177, %v82
    %v179 = vmul.f32 %v176, %v86
    %v180 = vadd.f32 %v61, %v178
    %v181 = vadd.f32 %v68, %v179
    %182 = vrot.lane.b32.xlu0 %v61, 127
    %v183 = vpop.permute.xlu0 %182
    %184 = vrot.lane.b32.xlu0 %v68, 127
    %v185 = vpop.permute.xlu0 %184
    %v186 = vsel %vm97, %v183, %v185
    %v187 = vsel %vm97, %v185, %v183
    %v188 = vmul.f32 %v186, %v104
    %v189 = vmul.f32 %v187, %v108
    %v190 = vadd.f32 %v180, %v188
    %v191 = vadd.f32 %v181, %v189
    %192 = vrot.lane.b32.xlu0 %v190, 16
    %v193 = vpop.permute.xlu0 %192
    %194 = vrot.lane.b32.xlu0 %v191, 16
    %v195 = vpop.permute.xlu0 %194
    %v196 = vsel %vm119, %v193, %v195
    %v197 = vsel %vm119, %v195, %v193
    %v198 = vmul.f32 %v197, %v126
    %v199 = vmul.f32 %v196, %v130
    %v200 = vadd.f32 %v190, %v198
    %v201 = vadd.f32 %v191, %v199
    %202 = vrot.lane.b32.xlu0 %v190, 112
    %v203 = vpop.permute.xlu0 %202
    %204 = vrot.lane.b32.xlu0 %v191, 112
    %v205 = vpop.permute.xlu0 %204
    %v206 = vsel %vm141, %v203, %v205
    %v207 = vsel %vm141, %v205, %v203
    %v208 = vmul.f32 %v206, %v148
    %v209 = vmul.f32 %v207, %v152
    %v210 = vadd.f32 %v200, %v208
    %v211 = vadd.f32 %v201, %v209
    %v212 = vmul.f32 %v210, %v163
    %v213 = vmul.f32 %v211, %v167
    %v214 = vmul.f32 %v170, %v170
    %v215 = vmul.f32 %v171, %v171
    %v216 = vsub.f32 %v212, %v214
    %v217 = vsub.f32 %v213, %v215
    %s218 = sld [smem:[#allocation2]]
    %v219 = vstv %s218
    %v220 = vmul.f32 %v219, %v216
    %v221 = vmul.f32 %v219, %v217
    %s222 = sld [smem:[#allocation2 + $0x4]]
    %v223 = vstv %s222
    %v224 = vadd.f32 %v220, %v223
    %v225 = vadd.f32 %v221, %v223
    %v226 = vmax.f32 %v224, 0.0
    %v227 = vmax.f32 %v225, 0.0
    %s228 = sld [smem:[#allocation2 + $0x1]]
    %v229 = vstv %s228
    %v230 = vmul.f32 %v229, %v216
    %v231 = vmul.f32 %v229, %v217
    %s232 = sld [smem:[#allocation2 + $0x5]]
    %v233 = vstv %s232
    %v234 = vadd.f32 %v230, %v233
    %v235 = vadd.f32 %v231, %v233
    %v236 = vmax.f32 %v234, 0.0
    %v237 = vmax.f32 %v235, 0.0
    %s238 = sld [smem:[#allocation2 + $0x2]]
    %v239 = vstv %s238
    %v240 = vmul.f32 %v239, %v216
    %v241 = vmul.f32 %v239, %v217
    %s242 = sld [smem:[#allocation2 + $0x6]]
    %v243 = vstv %s242
    %v244 = vadd.f32 %v240, %v243
    %v245 = vadd.f32 %v241, %v243
    %v246 = vmax.f32 %v244, 0.0
    %v247 = vmax.f32 %v245, 0.0
    %s248 = sld [smem:[#allocation2 + $0x3]]
    %v249 = vstv %s248
    %v250 = vmul.f32 %v249, %v216
    %v251 = vmul.f32 %v249, %v217
    %s252 = sld [smem:[#allocation2 + $0x7]]
    %v253 = vstv %s252
    %v254 = vadd.f32 %v250, %v253
    %v255 = vadd.f32 %v251, %v253
    %v256 = vmax.f32 %v254, 0.0
    %v257 = vmax.f32 %v255, 0.0
    %s258 = sld [smem:[#allocation2 + $0xc]]
    %v259 = vstv %s258
    %v260 = vmul.f32 %v259, %v226
    %v261 = vmul.f32 %v259, %v227
    %s262 = sld [smem:[#allocation2 + $0xd]]
    %v263 = vstv %s262
    %v264 = vmul.f32 %v263, %v236
    %v265 = vmul.f32 %v263, %v237
    %v266 = vadd.f32 %v260, %v264
    %v267 = vadd.f32 %v261, %v265
    %s268 = sld [smem:[#allocation2 + $0xe]]
    %v269 = vstv %s268
    %v270 = vmul.f32 %v269, %v246
    %v271 = vmul.f32 %v269, %v247
    %v272 = vadd.f32 %v266, %v270
    %v273 = vadd.f32 %v267, %v271
    %s274 = sld [smem:[#allocation2 + $0xf]]
    %v275 = vstv %s274
    %v276 = vmul.f32 %v275, %v256
    %v277 = vmul.f32 %v275, %v257
    %v278 = vadd.f32 %v272, %v276
    %v279 = vadd.f32 %v273, %v277
    %s280 = sld [smem:[#allocation2 + $0x8]]
    %v281 = vstv %s280
    %v282 = vadd.f32 %v278, %v281
    %v283 = vadd.f32 %v279, %v281
    %v284 = vmax.f32 %v282, 0.0
    %v285 = vmax.f32 %v283, 0.0
    %s286 = sld [smem:[#allocation2 + $0x10]]
    %v287 = vstv %s286
    %v288 = vmul.f32 %v287, %v226
    %v289 = vmul.f32 %v287, %v227
    %s290 = sld [smem:[#allocation2 + $0x11]]
    %v291 = vstv %s290
    %v292 = vmul.f32 %v291, %v236
    %v293 = vmul.f32 %v291, %v237
    %v294 = vadd.f32 %v288, %v292
    %v295 = vadd.f32 %v289, %v293
    %s296 = sld [smem:[#allocation2 + $0x12]]
    %v297 = vstv %s296
    %v298 = vmul.f32 %v297, %v246
    %v299 = vmul.f32 %v297, %v247
    %v300 = vadd.f32 %v294, %v298
    %v301 = vadd.f32 %v295, %v299
    %s302 = sld [smem:[#allocation2 + $0x13]]
    %v303 = vstv %s302
    %v304 = vmul.f32 %v303, %v256
    %v305 = vmul.f32 %v303, %v257
    %v306 = vadd.f32 %v300, %v304
    %v307 = vadd.f32 %v301, %v305
    %s308 = sld [smem:[#allocation2 + $0x9]]
    %v309 = vstv %s308
    %v310 = vadd.f32 %v306, %v309
    %v311 = vadd.f32 %v307, %v309
    %v312 = vmax.f32 %v310, 0.0
    %v313 = vmax.f32 %v311, 0.0
    %s314 = sld [smem:[#allocation2 + $0x14]]
    %v315 = vstv %s314
    %v316 = vmul.f32 %v315, %v226
    %v317 = vmul.f32 %v315, %v227
    %s318 = sld [smem:[#allocation2 + $0x15]]
    %v319 = vstv %s318
    %v320 = vmul.f32 %v319, %v236
    %v321 = vmul.f32 %v319, %v237
    %v322 = vadd.f32 %v316, %v320
    %v323 = vadd.f32 %v317, %v321
    %s324 = sld [smem:[#allocation2 + $0x16]]
    %v325 = vstv %s324
    %v326 = vmul.f32 %v325, %v246
    %v327 = vmul.f32 %v325, %v247
    %v328 = vadd.f32 %v322, %v326
    %v329 = vadd.f32 %v323, %v327
    %s330 = sld [smem:[#allocation2 + $0x17]]
    %v331 = vstv %s330
    %v332 = vmul.f32 %v331, %v256
    %v333 = vmul.f32 %v331, %v257
    %v334 = vadd.f32 %v328, %v332
    %v335 = vadd.f32 %v329, %v333
    %s336 = sld [smem:[#allocation2 + $0xa]]
    %v337 = vstv %s336
    %v338 = vadd.f32 %v334, %v337
    %v339 = vadd.f32 %v335, %v337
    %v340 = vmax.f32 %v338, 0.0
    %v341 = vmax.f32 %v339, 0.0
    %s342 = sld [smem:[#allocation2 + $0x18]]
    %v343 = vstv %s342
    %v344 = vmul.f32 %v343, %v226
    %v345 = vmul.f32 %v343, %v227
    %s346 = sld [smem:[#allocation2 + $0x19]]
    %v347 = vstv %s346
    %v348 = vmul.f32 %v347, %v236
    %v349 = vmul.f32 %v347, %v237
    %v350 = vadd.f32 %v344, %v348
    %v351 = vadd.f32 %v345, %v349
    %s352 = sld [smem:[#allocation2 + $0x1a]]
    %v353 = vstv %s352
    %v354 = vmul.f32 %v353, %v246
    %v355 = vmul.f32 %v353, %v247
    %v356 = vadd.f32 %v350, %v354
    %v357 = vadd.f32 %v351, %v355
    %s358 = sld [smem:[#allocation2 + $0x1b]]
    %v359 = vstv %s358
    %v360 = vmul.f32 %v359, %v256
    %v361 = vmul.f32 %v359, %v257
    %v362 = vadd.f32 %v356, %v360
    %v363 = vadd.f32 %v357, %v361
    %s364 = sld [smem:[#allocation2 + $0xb]]
    %v365 = vstv %s364
    %v366 = vadd.f32 %v362, %v365
    %v367 = vadd.f32 %v363, %v365
    %v368 = vmax.f32 %v366, 0.0
    %v369 = vmax.f32 %v367, 0.0
    %s370 = sld [smem:[#allocation2 + $0x1c]]
    %v371 = vstv %s370
    %v372 = vmul.f32 %v371, %v284
    %v373 = vmul.f32 %v371, %v285
    %s374 = sld [smem:[#allocation2 + $0x1d]]
    %v375 = vstv %s374
    %v376 = vmul.f32 %v375, %v312
    %v377 = vmul.f32 %v375, %v313
    %v378 = vadd.f32 %v372, %v376
    %v379 = vadd.f32 %v373, %v377
    %s380 = sld [smem:[#allocation2 + $0x1e]]
    %v381 = vstv %s380
    %v382 = vmul.f32 %v381, %v340
    %v383 = vmul.f32 %v381, %v341
    %v384 = vadd.f32 %v378, %v382
    %v385 = vadd.f32 %v379, %v383
    %s386 = sld [smem:[#allocation2 + $0x1f]]
    %v387 = vstv %s386
    %v388 = vmul.f32 %v387, %v368
    %v389 = vmul.f32 %v387, %v369
    %v390 = vadd.f32 %v384, %v388
    %v391 = vadd.f32 %v385, %v389
    %v392 = vld [vmem:[%s0] ss:$8 sm:$0x3]
    %v395 = vcombine.low %v170, %v171
    %v397 = vunpack.c.l.s4 1966171168
    %v398 = vunpack.c.0.s8 %v397
    %v399 = vlaneseq
    %v400 = vshrl.u32 %v399, 7
    %v401 = vsub.s32 %v398, %v400
    %v402 = vrot.slane %v395, %v401
    %v404 = vunpack.c.l.s4 1966171168
    %v405 = vunpack.c.0.s8 %v404
    %v406 = vlaneseq
    %v407 = vshrl.u32 %v406, 7
    %v408 = vsub.s32 %v405, %v407
    %v409 = vrot.slane %v402, %v408
    %v411 = vsub.f32 %v392, %v409
    %v413 = vlaneseq
    %v414 = vshrl.u32 %v413, 7
    %v415 = vsub.s32 0, %v414
    %v416 = vrot.slane %v411, %v415
    %v417 = vlaneseq
    %v418 = vshrl.u32 %v417, 7
    %v419 = vsub.s32 1, %v418
    %v420 = vrot.slane %v411, %v419
    %v423 = vmul.f32 %v390, %v416
    %v424 = vmul.f32 %v391, %v420
    %v425 = vadd.f32 %v423, %v170
    %v426 = vadd.f32 %v424, %v171
    %v429 = vcombine.low %v425, %v426
    %v431 = vunpack.c.l.s4 1966171168
    %v432 = vunpack.c.0.s8 %v431
    %v433 = vlaneseq
    %v434 = vshrl.u32 %v433, 7
    %v435 = vsub.s32 %v432, %v434
    %v436 = vrot.slane %v429, %v435
    %v438 = vunpack.c.l.s4 1966171168
    %v439 = vunpack.c.0.s8 %v438
    %v440 = vlaneseq
    %v441 = vshrl.u32 %v440, 7
    %v442 = vsub.s32 %v439, %v441
    %v443 = vrot.slane %v436, %v442
    %v445 = vlaneseq
    %vm446 = vcmp.ge.s32.totalorder %v445, 0
    %vm447 = vcmp.lt.s32.totalorder %v445, 256
    %vm448 = vmand %vm446, %vm447
    %449 = vst.msk [vmem:[%s3] ss:$8 sm:$0x3] %vm448, %v443
    %450 = vst.msk [vmem:[%s3] ss:$8 sm:$0x0] %vm448, %v443
    %s451 = sld [smem:[#allocation2 + $0x20]]
    %v452 = vstv %s451
    %v453 = vmul.f32 %v452, %v284
    %v454 = vmul.f32 %v452, %v285
    %s455 = sld [smem:[#allocation2 + $0x21]]
    %v456 = vstv %s455
    %v457 = vmul.f32 %v456, %v312
    %v458 = vmul.f32 %v456, %v313
    %v459 = vadd.f32 %v453, %v457
    %v460 = vadd.f32 %v454, %v458
    %s461 = sld [smem:[#allocation2 + $0x22]]
    %v462 = vstv %s461
    %v463 = vmul.f32 %v462, %v340
    %v464 = vmul.f32 %v462, %v341
    %v465 = vadd.f32 %v459, %v463
    %v466 = vadd.f32 %v460, %v464
    %s467 = sld [smem:[#allocation2 + $0x23]]
    %v468 = vstv %s467
    %v469 = vmul.f32 %v468, %v368
    %v470 = vmul.f32 %v468, %v369
    %v471 = vadd.f32 %v465, %v469
    %v472 = vadd.f32 %v466, %v470
    %s473 = scalar_lea.vmem %s0, 1
    %v474 = vld [vmem:[%s473] ss:$8 sm:$0x3]
    %v475 = vsub.f32 %v474, %v409
    %v477 = vlaneseq
    %v478 = vshrl.u32 %v477, 7
    %v479 = vsub.s32 0, %v478
    %v480 = vrot.slane %v475, %v479
    %v481 = vlaneseq
    %v482 = vshrl.u32 %v481, 7
    %v483 = vsub.s32 1, %v482
    %v484 = vrot.slane %v475, %v483
    %v487 = vmul.f32 %v471, %v480
    %v488 = vmul.f32 %v472, %v484
    %v489 = vadd.f32 %v487, %v170
    %v490 = vadd.f32 %v488, %v171
    %v493 = vcombine.low %v489, %v490
    %v495 = vunpack.c.l.s4 1966171168
    %v496 = vunpack.c.0.s8 %v495
    %v497 = vlaneseq
    %v498 = vshrl.u32 %v497, 7
    %v499 = vsub.s32 %v496, %v498
    %v500 = vrot.slane %v493, %v499
    %v502 = vunpack.c.l.s4 1966171168
    %v503 = vunpack.c.0.s8 %v502
    %v504 = vlaneseq
    %v505 = vshrl.u32 %v504, 7
    %v506 = vsub.s32 %v503, %v505
    %v507 = vrot.slane %v500, %v506
    %s509 = scalar_lea.vmem %s3, 1
    %510 = vst.msk [vmem:[%s509] ss:$8 sm:$0x3] %vm448, %v507
    %511 = vst.msk [vmem:[%s509] ss:$8 sm:$0x0] %vm448, %v507
    %s512 = sld [smem:[#allocation2 + $0x24]]
    %v513 = vstv %s512
    %v514 = vmul.f32 %v513, %v284
    %v515 = vmul.f32 %v513, %v285
    %s516 = sld [smem:[#allocation2 + $0x25]]
    %v517 = vstv %s516
    %v518 = vmul.f32 %v517, %v312
    %v519 = vmul.f32 %v517, %v313
    %v520 = vadd.f32 %v514, %v518
    %v521 = vadd.f32 %v515, %v519
    %s522 = sld [smem:[#allocation2 + $0x26]]
    %v523 = vstv %s522
    %v524 = vmul.f32 %v523, %v340
    %v525 = vmul.f32 %v523, %v341
    %v526 = vadd.f32 %v520, %v524
    %v527 = vadd.f32 %v521, %v525
    %s528 = sld [smem:[#allocation2 + $0x27]]
    %v529 = vstv %s528
    %v530 = vmul.f32 %v529, %v368
    %v531 = vmul.f32 %v529, %v369
    %v532 = vadd.f32 %v526, %v530
    %v533 = vadd.f32 %v527, %v531
    %s534 = scalar_lea.vmem %s0, 2
    %v535 = vld [vmem:[%s534] ss:$8 sm:$0x3]
    %v536 = vsub.f32 %v535, %v409
    %v538 = vlaneseq
    %v539 = vshrl.u32 %v538, 7
    %v540 = vsub.s32 0, %v539
    %v541 = vrot.slane %v536, %v540
    %v542 = vlaneseq
    %v543 = vshrl.u32 %v542, 7
    %v544 = vsub.s32 1, %v543
    %v545 = vrot.slane %v536, %v544
    %v548 = vmul.f32 %v532, %v541
    %v549 = vmul.f32 %v533, %v545
    %v550 = vadd.f32 %v548, %v170
    %v551 = vadd.f32 %v549, %v171
    %v554 = vcombine.low %v550, %v551
    %v556 = vunpack.c.l.s4 1966171168
    %v557 = vunpack.c.0.s8 %v556
    %v558 = vlaneseq
    %v559 = vshrl.u32 %v558, 7
    %v560 = vsub.s32 %v557, %v559
    %v561 = vrot.slane %v554, %v560
    %v563 = vunpack.c.l.s4 1966171168
    %v564 = vunpack.c.0.s8 %v563
    %v565 = vlaneseq
    %v566 = vshrl.u32 %v565, 7
    %v567 = vsub.s32 %v564, %v566
    %v568 = vrot.slane %v561, %v567
    %s570 = scalar_lea.vmem %s3, 2
    %571 = vst.msk [vmem:[%s570] ss:$8 sm:$0x3] %vm448, %v568
    %572 = vst.msk [vmem:[%s570] ss:$8 sm:$0x0] %vm448, %v568
    %s573 = sld [smem:[#allocation2 + $0x28]]
    %v574 = vstv %s573
    %v575 = vmul.f32 %v574, %v284
    %v576 = vmul.f32 %v574, %v285
    %s577 = sld [smem:[#allocation2 + $0x29]]
    %v578 = vstv %s577
    %v579 = vmul.f32 %v578, %v312
    %v580 = vmul.f32 %v578, %v313
    %v581 = vadd.f32 %v575, %v579
    %v582 = vadd.f32 %v576, %v580
    %s583 = sld [smem:[#allocation2 + $0x2a]]
    %v584 = vstv %s583
    %v585 = vmul.f32 %v584, %v340
    %v586 = vmul.f32 %v584, %v341
    %v587 = vadd.f32 %v581, %v585
    %v588 = vadd.f32 %v582, %v586
    %s589 = sld [smem:[#allocation2 + $0x2b]]
    %v590 = vstv %s589
    %v591 = vmul.f32 %v590, %v368
    %v592 = vmul.f32 %v590, %v369
    %v593 = vadd.f32 %v587, %v591
    %v594 = vadd.f32 %v588, %v592
    %s595 = scalar_lea.vmem %s0, 3
    %v596 = vld [vmem:[%s595] ss:$8 sm:$0x3]
    %v597 = vsub.f32 %v596, %v409
    %v599 = vlaneseq
    %v600 = vshrl.u32 %v599, 7
    %v601 = vsub.s32 0, %v600
    %v602 = vrot.slane %v597, %v601
    %v603 = vlaneseq
    %v604 = vshrl.u32 %v603, 7
    %v605 = vsub.s32 1, %v604
    %v606 = vrot.slane %v597, %v605
    %v609 = vmul.f32 %v593, %v602
    %v610 = vmul.f32 %v594, %v606
    %v611 = vadd.f32 %v609, %v170
    %v612 = vadd.f32 %v610, %v171
    %v615 = vcombine.low %v611, %v612
    %v617 = vunpack.c.l.s4 1966171168
    %v618 = vunpack.c.0.s8 %v617
    %v619 = vlaneseq
    %v620 = vshrl.u32 %v619, 7
    %v621 = vsub.s32 %v618, %v620
    %v622 = vrot.slane %v615, %v621
    %v624 = vunpack.c.l.s4 1966171168
    %v625 = vunpack.c.0.s8 %v624
    %v626 = vlaneseq
    %v627 = vshrl.u32 %v626, 7
    %v628 = vsub.s32 %v625, %v627
    %v629 = vrot.slane %v622, %v628
    %s631 = scalar_lea.vmem %s3, 3
    %632 = vst.msk [vmem:[%s631] ss:$8 sm:$0x3] %vm448, %v629
    %633 = vst.msk [vmem:[%s631] ss:$8 sm:$0x0] %vm448, %v629
    %v634 = vld [vmem:[%s0] sm:$0xf0]
    %v635 = vld [vmem:[%s0 + $0x8] sm:$0xf0]
    %v638 = vrot.slane %v634, 4
    %v639 = vrot.slane %v635, 4
    %v642 = vsel %vm38, %v638, 0.0
    %v643 = vrot.slane %v642, 4
    %v644 = vadd.f32 %v642, %v643
    %v645 = vrot.slane %v644, 2
    %v646 = vadd.f32 %v644, %v645
    %v647 = vrot.slane %v646, 1
    %v648 = vadd.f32 %v646, %v647
    %v649 = vsel %vm38, %v639, 0.0
    %v650 = vrot.slane %v649, 4
    %v651 = vadd.f32 %v649, %v650
    %v652 = vrot.slane %v651, 2
    %v653 = vadd.f32 %v651, %v652
    %v654 = vrot.slane %v653, 1
    %v655 = vadd.f32 %v653, %v654
    %v656 = vmul.f32 %v634, %v634
    %v657 = vmul.f32 %v635, %v635
    %v660 = vrot.slane %v656, 4
    %v661 = vrot.slane %v657, 4
    %v664 = vsel %vm38, %v660, 0.0
    %v665 = vrot.slane %v664, 4
    %v666 = vadd.f32 %v664, %v665
    %v667 = vrot.slane %v666, 2
    %v668 = vadd.f32 %v666, %v667
    %v669 = vrot.slane %v668, 1
    %v670 = vadd.f32 %v668, %v669
    %v671 = vsel %vm38, %v661, 0.0
    %v672 = vrot.slane %v671, 4
    %v673 = vadd.f32 %v671, %v672
    %v674 = vrot.slane %v673, 2
    %v675 = vadd.f32 %v673, %v674
    %v676 = vrot.slane %v675, 1
    %v677 = vadd.f32 %v675, %v676
    %678 = vrot.lane.b32.xlu0 %v648, 1
    %v679 = vpop.permute.xlu0 %678
    %680 = vrot.lane.b32.xlu0 %v655, 1
    %v681 = vpop.permute.xlu0 %680
    %v682 = vsel %vm75, %v679, %v681
    %v683 = vsel %vm75, %v681, %v679
    %v684 = vmul.f32 %v683, %v82
    %v685 = vmul.f32 %v682, %v86
    %v686 = vadd.f32 %v648, %v684
    %v687 = vadd.f32 %v655, %v685
    %688 = vrot.lane.b32.xlu0 %v648, 127
    %v689 = vpop.permute.xlu0 %688
    %690 = vrot.lane.b32.xlu0 %v655, 127
    %v691 = vpop.permute.xlu0 %690
    %v692 = vsel %vm97, %v689, %v691
    %v693 = vsel %vm97, %v691, %v689
    %v694 = vmul.f32 %v692, %v104
    %v695 = vmul.f32 %v693, %v108
    %v696 = vadd.f32 %v686, %v694
    %v697 = vadd.f32 %v687, %v695
    %698 = vrot.lane.b32.xlu0 %v696, 16
    %v699 = vpop.permute.xlu0 %698
    %700 = vrot.lane.b32.xlu0 %v697, 16
    %v701 = vpop.permute.xlu0 %700
    %v702 = vsel %vm119, %v699, %v701
    %v703 = vsel %vm119, %v701, %v699
    %v704 = vmul.f32 %v703, %v126
    %v705 = vmul.f32 %v702, %v130
    %v706 = vadd.f32 %v696, %v704
    %v707 = vadd.f32 %v697, %v705
    %708 = vrot.lane.b32.xlu0 %v696, 112
    %v709 = vpop.permute.xlu0 %708
    %710 = vrot.lane.b32.xlu0 %v697, 112
    %v711 = vpop.permute.xlu0 %710
    %v712 = vsel %vm141, %v709, %v711
    %v713 = vsel %vm141, %v711, %v709
    %v714 = vmul.f32 %v712, %v148
    %v715 = vmul.f32 %v713, %v152
    %v716 = vadd.f32 %v706, %v714
    %v717 = vadd.f32 %v707, %v715
    %v718 = vmul.f32 %v716, %v163
    %v719 = vmul.f32 %v717, %v167
    %720 = vrot.lane.b32.xlu0 %v670, 1
    %v721 = vpop.permute.xlu0 %720
    %722 = vrot.lane.b32.xlu0 %v677, 1
    %v723 = vpop.permute.xlu0 %722
    %v724 = vsel %vm75, %v721, %v723
    %v725 = vsel %vm75, %v723, %v721
    %v726 = vmul.f32 %v725, %v82
    %v727 = vmul.f32 %v724, %v86
    %v728 = vadd.f32 %v670, %v726
    %v729 = vadd.f32 %v677, %v727
    %730 = vrot.lane.b32.xlu0 %v670, 127
    %v731 = vpop.permute.xlu0 %730
    %732 = vrot.lane.b32.xlu0 %v677, 127
    %v733 = vpop.permute.xlu0 %732
    %v734 = vsel %vm97, %v731, %v733
    %v735 = vsel %vm97, %v733, %v731
    %v736 = vmul.f32 %v734, %v104
    %v737 = vmul.f32 %v735, %v108
    %v738 = vadd.f32 %v728, %v736
    %v739 = vadd.f32 %v729, %v737
    %740 = vrot.lane.b32.xlu0 %v738, 16
    %v741 = vpop.permute.xlu0 %740
    %742 = vrot.lane.b32.xlu0 %v739, 16
    %v743 = vpop.permute.xlu0 %742
    %v744 = vsel %vm119, %v741, %v743
    %v745 = vsel %vm119, %v743, %v741
    %v746 = vmul.f32 %v745, %v126
    %v747 = vmul.f32 %v744, %v130
    %v748 = vadd.f32 %v738, %v746
    %v749 = vadd.f32 %v739, %v747
    %750 = vrot.lane.b32.xlu0 %v738, 112
    %v751 = vpop.permute.xlu0 %750
    %752 = vrot.lane.b32.xlu0 %v739, 112
    %v753 = vpop.permute.xlu0 %752
    %v754 = vsel %vm141, %v751, %v753
    %v755 = vsel %vm141, %v753, %v751
    %v756 = vmul.f32 %v754, %v148
    %v757 = vmul.f32 %v755, %v152
    %v758 = vadd.f32 %v748, %v756
    %v759 = vadd.f32 %v749, %v757
    %v760 = vmul.f32 %v758, %v163
    %v761 = vmul.f32 %v759, %v167
    %v762 = vmul.f32 %v718, %v718
    %v763 = vmul.f32 %v719, %v719
    %v764 = vsub.f32 %v760, %v762
    %v765 = vsub.f32 %v761, %v763
    %s766 = sld [smem:[#allocation2]]
    %v767 = vstv %s766
    %v768 = vmul.f32 %v767, %v764
    %v769 = vmul.f32 %v767, %v765
    %s770 = sld [smem:[#allocation2 + $0x4]]
    %v771 = vstv %s770
    %v772 = vadd.f32 %v768, %v771
    %v773 = vadd.f32 %v769, %v771
    %v774 = vmax.f32 %v772, 0.0
    %v775 = vmax.f32 %v773, 0.0
    %s776 = sld [smem:[#allocation2 + $0x1]]
    %v777 = vstv %s776
    %v778 = vmul.f32 %v777, %v764
    %v779 = vmul.f32 %v777, %v765
    %s780 = sld [smem:[#allocation2 + $0x5]]
    %v781 = vstv %s780
    %v782 = vadd.f32 %v778, %v781
    %v783 = vadd.f32 %v779, %v781
    %v784 = vmax.f32 %v782, 0.0
    %v785 = vmax.f32 %v783, 0.0
    %s786 = sld [smem:[#allocation2 + $0x2]]
    %v787 = vstv %s786
    %v788 = vmul.f32 %v787, %v764
    %v789 = vmul.f32 %v787, %v765
    %s790 = sld [smem:[#allocation2 + $0x6]]
    %v791 = vstv %s790
    %v792 = vadd.f32 %v788, %v791
    %v793 = vadd.f32 %v789, %v791
    %v794 = vmax.f32 %v792, 0.0
    %v795 = vmax.f32 %v793, 0.0
    %s796 = sld [smem:[#allocation2 + $0x3]]
    %v797 = vstv %s796
    %v798 = vmul.f32 %v797, %v764
    %v799 = vmul.f32 %v797, %v765
    %s800 = sld [smem:[#allocation2 + $0x7]]
    %v801 = vstv %s800
    %v802 = vadd.f32 %v798, %v801
    %v803 = vadd.f32 %v799, %v801
    %v804 = vmax.f32 %v802, 0.0
    %v805 = vmax.f32 %v803, 0.0
    %s806 = sld [smem:[#allocation2 + $0xc]]
    %v807 = vstv %s806
    %v808 = vmul.f32 %v807, %v774
    %v809 = vmul.f32 %v807, %v775
    %s810 = sld [smem:[#allocation2 + $0xd]]
    %v811 = vstv %s810
    %v812 = vmul.f32 %v811, %v784
    %v813 = vmul.f32 %v811, %v785
    %v814 = vadd.f32 %v808, %v812
    %v815 = vadd.f32 %v809, %v813
    %s816 = sld [smem:[#allocation2 + $0xe]]
    %v817 = vstv %s816
    %v818 = vmul.f32 %v817, %v794
    %v819 = vmul.f32 %v817, %v795
    %v820 = vadd.f32 %v814, %v818
    %v821 = vadd.f32 %v815, %v819
    %s822 = sld [smem:[#allocation2 + $0xf]]
    %v823 = vstv %s822
    %v824 = vmul.f32 %v823, %v804
    %v825 = vmul.f32 %v823, %v805
    %v826 = vadd.f32 %v820, %v824
    %v827 = vadd.f32 %v821, %v825
    %s828 = sld [smem:[#allocation2 + $0x8]]
    %v829 = vstv %s828
    %v830 = vadd.f32 %v826, %v829
    %v831 = vadd.f32 %v827, %v829
    %v832 = vmax.f32 %v830, 0.0
    %v833 = vmax.f32 %v831, 0.0
    %s834 = sld [smem:[#allocation2 + $0x10]]
    %v835 = vstv %s834
    %v836 = vmul.f32 %v835, %v774
    %v837 = vmul.f32 %v835, %v775
    %s838 = sld [smem:[#allocation2 + $0x11]]
    %v839 = vstv %s838
    %v840 = vmul.f32 %v839, %v784
    %v841 = vmul.f32 %v839, %v785
    %v842 = vadd.f32 %v836, %v840
    %v843 = vadd.f32 %v837, %v841
    %s844 = sld [smem:[#allocation2 + $0x12]]
    %v845 = vstv %s844
    %v846 = vmul.f32 %v845, %v794
    %v847 = vmul.f32 %v845, %v795
    %v848 = vadd.f32 %v842, %v846
    %v849 = vadd.f32 %v843, %v847
    %s850 = sld [smem:[#allocation2 + $0x13]]
    %v851 = vstv %s850
    %v852 = vmul.f32 %v851, %v804
    %v853 = vmul.f32 %v851, %v805
    %v854 = vadd.f32 %v848, %v852
    %v855 = vadd.f32 %v849, %v853
    %s856 = sld [smem:[#allocation2 + $0x9]]
    %v857 = vstv %s856
    %v858 = vadd.f32 %v854, %v857
    %v859 = vadd.f32 %v855, %v857
    %v860 = vmax.f32 %v858, 0.0
    %v861 = vmax.f32 %v859, 0.0
    %s862 = sld [smem:[#allocation2 + $0x14]]
    %v863 = vstv %s862
    %v864 = vmul.f32 %v863, %v774
    %v865 = vmul.f32 %v863, %v775
    %s866 = sld [smem:[#allocation2 + $0x15]]
    %v867 = vstv %s866
    %v868 = vmul.f32 %v867, %v784
    %v869 = vmul.f32 %v867, %v785
    %v870 = vadd.f32 %v864, %v868
    %v871 = vadd.f32 %v865, %v869
    %s872 = sld [smem:[#allocation2 + $0x16]]
    %v873 = vstv %s872
    %v874 = vmul.f32 %v873, %v794
    %v875 = vmul.f32 %v873, %v795
    %v876 = vadd.f32 %v870, %v874
    %v877 = vadd.f32 %v871, %v875
    %s878 = sld [smem:[#allocation2 + $0x17]]
    %v879 = vstv %s878
    %v880 = vmul.f32 %v879, %v804
    %v881 = vmul.f32 %v879, %v805
    %v882 = vadd.f32 %v876, %v880
    %v883 = vadd.f32 %v877, %v881
    %s884 = sld [smem:[#allocation2 + $0xa]]
    %v885 = vstv %s884
    %v886 = vadd.f32 %v882, %v885
    %v887 = vadd.f32 %v883, %v885
    %v888 = vmax.f32 %v886, 0.0
    %v889 = vmax.f32 %v887, 0.0
    %s890 = sld [smem:[#allocation2 + $0x18]]
    %v891 = vstv %s890
    %v892 = vmul.f32 %v891, %v774
    %v893 = vmul.f32 %v891, %v775
    %s894 = sld [smem:[#allocation2 + $0x19]]
    %v895 = vstv %s894
    %v896 = vmul.f32 %v895, %v784
    %v897 = vmul.f32 %v895, %v785
    %v898 = vadd.f32 %v892, %v896
    %v899 = vadd.f32 %v893, %v897
    %s900 = sld [smem:[#allocation2 + $0x1a]]
    %v901 = vstv %s900
    %v902 = vmul.f32 %v901, %v794
    %v903 = vmul.f32 %v901, %v795
    %v904 = vadd.f32 %v898, %v902
    %v905 = vadd.f32 %v899, %v903
    %s906 = sld [smem:[#allocation2 + $0x1b]]
    %v907 = vstv %s906
    %v908 = vmul.f32 %v907, %v804
    %v909 = vmul.f32 %v907, %v805
    %v910 = vadd.f32 %v904, %v908
    %v911 = vadd.f32 %v905, %v909
    %s912 = sld [smem:[#allocation2 + $0xb]]
    %v913 = vstv %s912
    %v914 = vadd.f32 %v910, %v913
    %v915 = vadd.f32 %v911, %v913
    %v916 = vmax.f32 %v914, 0.0
    %v917 = vmax.f32 %v915, 0.0
    %s918 = sld [smem:[#allocation2 + $0x1c]]
    %v919 = vstv %s918
    %v920 = vmul.f32 %v919, %v832
    %v921 = vmul.f32 %v919, %v833
    %s922 = sld [smem:[#allocation2 + $0x1d]]
    %v923 = vstv %s922
    %v924 = vmul.f32 %v923, %v860
    %v925 = vmul.f32 %v923, %v861
    %v926 = vadd.f32 %v920, %v924
    %v927 = vadd.f32 %v921, %v925
    %s928 = sld [smem:[#allocation2 + $0x1e]]
    %v929 = vstv %s928
    %v930 = vmul.f32 %v929, %v888
    %v931 = vmul.f32 %v929, %v889
    %v932 = vadd.f32 %v926, %v930
    %v933 = vadd.f32 %v927, %v931
    %s934 = sld [smem:[#allocation2 + $0x1f]]
    %v935 = vstv %s934
    %v936 = vmul.f32 %v935, %v916
    %v937 = vmul.f32 %v935, %v917
    %v938 = vadd.f32 %v932, %v936
    %v939 = vadd.f32 %v933, %v937
    %s940 = scalar_lea.vmem %s0, 4
    %v941 = vld [vmem:[%s940] ss:$8 sm:$0x3]
    %v944 = vcombine.low %v718, %v719
    %v946 = vunpack.c.l.s4 1966171168
    %v947 = vunpack.c.0.s8 %v946
    %v948 = vlaneseq
    %v949 = vshrl.u32 %v948, 7
    %v950 = vsub.s32 %v947, %v949
    %v951 = vrot.slane %v944, %v950
    %v953 = vunpack.c.l.s4 1966171168
    %v954 = vunpack.c.0.s8 %v953
    %v955 = vlaneseq
    %v956 = vshrl.u32 %v955, 7
    %v957 = vsub.s32 %v954, %v956
    %v958 = vrot.slane %v951, %v957
    %v960 = vsub.f32 %v941, %v958
    %v962 = vlaneseq
    %v963 = vshrl.u32 %v962, 7
    %v964 = vsub.s32 0, %v963
    %v965 = vrot.slane %v960, %v964
    %v966 = vlaneseq
    %v967 = vshrl.u32 %v966, 7
    %v968 = vsub.s32 1, %v967
    %v969 = vrot.slane %v960, %v968
    %v972 = vmul.f32 %v938, %v965
    %v973 = vmul.f32 %v939, %v969
    %v974 = vadd.f32 %v972, %v718
    %v975 = vadd.f32 %v973, %v719
    %v978 = vcombine.low %v974, %v975
    %v980 = vunpack.c.l.s4 1966171168
    %v981 = vunpack.c.0.s8 %v980
    %v982 = vlaneseq
    %v983 = vshrl.u32 %v982, 7
    %v984 = vsub.s32 %v981, %v983
    %v985 = vrot.slane %v978, %v984
    %v987 = vunpack.c.l.s4 1966171168
    %v988 = vunpack.c.0.s8 %v987
    %v989 = vlaneseq
    %v990 = vshrl.u32 %v989, 7
    %v991 = vsub.s32 %v988, %v990
    %v992 = vrot.slane %v985, %v991
    %s994 = scalar_lea.vmem %s3, 4
    %995 = vst.msk [vmem:[%s994] ss:$8 sm:$0x3] %vm448, %v992
    %996 = vst.msk [vmem:[%s994] ss:$8 sm:$0x0] %vm448, %v992
    %s997 = sld [smem:[#allocation2 + $0x20]]
    %v998 = vstv %s997
    %v999 = vmul.f32 %v998, %v832
    %v1000 = vmul.f32 %v998, %v833
    %s1001 = sld [smem:[#allocation2 + $0x21]]
    %v1002 = vstv %s1001
    %v1003 = vmul.f32 %v1002, %v860
    %v1004 = vmul.f32 %v1002, %v861
    %v1005 = vadd.f32 %v999, %v1003
    %v1006 = vadd.f32 %v1000, %v1004
    %s1007 = sld [smem:[#allocation2 + $0x22]]
    %v1008 = vstv %s1007
    %v1009 = vmul.f32 %v1008, %v888
    %v1010 = vmul.f32 %v1008, %v889
    %v1011 = vadd.f32 %v1005, %v1009
    %v1012 = vadd.f32 %v1006, %v1010
    %s1013 = sld [smem:[#allocation2 + $0x23]]
    %v1014 = vstv %s1013
    %v1015 = vmul.f32 %v1014, %v916
    %v1016 = vmul.f32 %v1014, %v917
    %v1017 = vadd.f32 %v1011, %v1015
    %v1018 = vadd.f32 %v1012, %v1016
    %s1019 = scalar_lea.vmem %s0, 5
    %v1020 = vld [vmem:[%s1019] ss:$8 sm:$0x3]
    %v1021 = vsub.f32 %v1020, %v958
    %v1023 = vlaneseq
    %v1024 = vshrl.u32 %v1023, 7
    %v1025 = vsub.s32 0, %v1024
    %v1026 = vrot.slane %v1021, %v1025
    %v1027 = vlaneseq
    %v1028 = vshrl.u32 %v1027, 7
    %v1029 = vsub.s32 1, %v1028
    %v1030 = vrot.slane %v1021, %v1029
    %v1033 = vmul.f32 %v1017, %v1026
    %v1034 = vmul.f32 %v1018, %v1030
    %v1035 = vadd.f32 %v1033, %v718
    %v1036 = vadd.f32 %v1034, %v719
    %v1039 = vcombine.low %v1035, %v1036
    %v1041 = vunpack.c.l.s4 1966171168
    %v1042 = vunpack.c.0.s8 %v1041
    %v1043 = vlaneseq
    %v1044 = vshrl.u32 %v1043, 7
    %v1045 = vsub.s32 %v1042, %v1044
    %v1046 = vrot.slane %v1039, %v1045
    %v1048 = vunpack.c.l.s4 1966171168
    %v1049 = vunpack.c.0.s8 %v1048
    %v1050 = vlaneseq
    %v1051 = vshrl.u32 %v1050, 7
    %v1052 = vsub.s32 %v1049, %v1051
    %v1053 = vrot.slane %v1046, %v1052
    %s1055 = scalar_lea.vmem %s3, 5
    %1056 = vst.msk [vmem:[%s1055] ss:$8 sm:$0x3] %vm448, %v1053
    %1057 = vst.msk [vmem:[%s1055] ss:$8 sm:$0x0] %vm448, %v1053
    %s1058 = sld [smem:[#allocation2 + $0x24]]
    %v1059 = vstv %s1058
    %v1060 = vmul.f32 %v1059, %v832
    %v1061 = vmul.f32 %v1059, %v833
    %s1062 = sld [smem:[#allocation2 + $0x25]]
    %v1063 = vstv %s1062
    %v1064 = vmul.f32 %v1063, %v860
    %v1065 = vmul.f32 %v1063, %v861
    %v1066 = vadd.f32 %v1060, %v1064
    %v1067 = vadd.f32 %v1061, %v1065
    %s1068 = sld [smem:[#allocation2 + $0x26]]
    %v1069 = vstv %s1068
    %v1070 = vmul.f32 %v1069, %v888
    %v1071 = vmul.f32 %v1069, %v889
    %v1072 = vadd.f32 %v1066, %v1070
    %v1073 = vadd.f32 %v1067, %v1071
    %s1074 = sld [smem:[#allocation2 + $0x27]]
    %v1075 = vstv %s1074
    %v1076 = vmul.f32 %v1075, %v916
    %v1077 = vmul.f32 %v1075, %v917
    %v1078 = vadd.f32 %v1072, %v1076
    %v1079 = vadd.f32 %v1073, %v1077
    %s1080 = scalar_lea.vmem %s0, 6
    %v1081 = vld [vmem:[%s1080] ss:$8 sm:$0x3]
    %v1082 = vsub.f32 %v1081, %v958
    %v1084 = vlaneseq
    %v1085 = vshrl.u32 %v1084, 7
    %v1086 = vsub.s32 0, %v1085
    %v1087 = vrot.slane %v1082, %v1086
    %v1088 = vlaneseq
    %v1089 = vshrl.u32 %v1088, 7
    %v1090 = vsub.s32 1, %v1089
    %v1091 = vrot.slane %v1082, %v1090
    %v1094 = vmul.f32 %v1078, %v1087
    %v1095 = vmul.f32 %v1079, %v1091
    %v1096 = vadd.f32 %v1094, %v718
    %v1097 = vadd.f32 %v1095, %v719
    %v1100 = vcombine.low %v1096, %v1097
    %v1102 = vunpack.c.l.s4 1966171168
    %v1103 = vunpack.c.0.s8 %v1102
    %v1104 = vlaneseq
    %v1105 = vshrl.u32 %v1104, 7
    %v1106 = vsub.s32 %v1103, %v1105
    %v1107 = vrot.slane %v1100, %v1106
    %v1109 = vunpack.c.l.s4 1966171168
    %v1110 = vunpack.c.0.s8 %v1109
    %v1111 = vlaneseq
    %v1112 = vshrl.u32 %v1111, 7
    %v1113 = vsub.s32 %v1110, %v1112
    %v1114 = vrot.slane %v1107, %v1113
    %s1116 = scalar_lea.vmem %s3, 6
    %1117 = vst.msk [vmem:[%s1116] ss:$8 sm:$0x3] %vm448, %v1114
    %1118 = vst.msk [vmem:[%s1116] ss:$8 sm:$0x0] %vm448, %v1114
    %s1119 = sld [smem:[#allocation2 + $0x28]]
    %v1120 = vstv %s1119
    %v1121 = vmul.f32 %v1120, %v832
    %v1122 = vmul.f32 %v1120, %v833
    %s1123 = sld [smem:[#allocation2 + $0x29]]
    %v1124 = vstv %s1123
    %v1125 = vmul.f32 %v1124, %v860
    %v1126 = vmul.f32 %v1124, %v861
    %v1127 = vadd.f32 %v1121, %v1125
    %v1128 = vadd.f32 %v1122, %v1126
    %s1129 = sld [smem:[#allocation2 + $0x2a]]
    %v1130 = vstv %s1129
    %v1131 = vmul.f32 %v1130, %v888
    %v1132 = vmul.f32 %v1130, %v889
    %v1133 = vadd.f32 %v1127, %v1131
    %v1134 = vadd.f32 %v1128, %v1132
    %s1135 = sld [smem:[#allocation2 + $0x2b]]
    %v1136 = vstv %s1135
    %v1137 = vmul.f32 %v1136, %v916
    %v1138 = vmul.f32 %v1136, %v917
    %v1139 = vadd.f32 %v1133, %v1137
    %v1140 = vadd.f32 %v1134, %v1138
    %s1141 = scalar_lea.vmem %s0, 7
    %v1142 = vld [vmem:[%s1141] ss:$8 sm:$0x3]
    %v1143 = vsub.f32 %v1142, %v958
    %v1145 = vlaneseq
    %v1146 = vshrl.u32 %v1145, 7
    %v1147 = vsub.s32 0, %v1146
    %v1148 = vrot.slane %v1143, %v1147
    %v1149 = vlaneseq
    %v1150 = vshrl.u32 %v1149, 7
    %v1151 = vsub.s32 1, %v1150
    %v1152 = vrot.slane %v1143, %v1151
    %v1155 = vmul.f32 %v1139, %v1148
    %v1156 = vmul.f32 %v1140, %v1152
    %v1157 = vadd.f32 %v1155, %v718
    %v1158 = vadd.f32 %v1156, %v719
    %v1161 = vcombine.low %v1157, %v1158
    %v1163 = vunpack.c.l.s4 1966171168
    %v1164 = vunpack.c.0.s8 %v1163
    %v1165 = vlaneseq
    %v1166 = vshrl.u32 %v1165, 7
    %v1167 = vsub.s32 %v1164, %v1166
    %v1168 = vrot.slane %v1161, %v1167
    %v1170 = vunpack.c.l.s4 1966171168
    %v1171 = vunpack.c.0.s8 %v1170
    %v1172 = vlaneseq
    %v1173 = vshrl.u32 %v1172, 7
    %v1174 = vsub.s32 %v1171, %v1173
    %v1175 = vrot.slane %v1168, %v1174
    %s1177 = scalar_lea.vmem %s3, 7
    %1178 = vst.msk [vmem:[%s1177] ss:$8 sm:$0x3] %vm448, %v1175
    %1179 = vst.msk [vmem:[%s1177] ss:$8 sm:$0x0] %vm448, %v1175
    // Predicated region
    $region18: #{conv_guided_filter.1} parent=1 // pred_check
      _
    $region19: #{conv_guided_filter.1} parent=1 // pred_check_branch
      %1181 = sbr.rel (0) target = $region21
    $region20: #{conv_guided_filter.1} parent=1 // pred_region
      _
    $region21: #{conv_guided_filter.1} parent=1 // pred_fallthru
      _
    // Predicated region
    $region22: #{conv_guided_filter.1} parent=1 // pred_check
      _
    $region23: #{conv_guided_filter.1} parent=1 // pred_check_branch
      %1183 = sbr.rel (0) target = $region25
    $region24: #{conv_guided_filter.1} parent=1 // pred_region
      _
    $region25: #{conv_guided_filter.1} parent=1 // pred_fallthru
      _
    %1184 = vsyncpa [#allocation3], 1

</llo_original>
